<compile_context>
chip_gen: v5e
topology: v5e:2x2
jax: 0.10.0
libtpu: 0.0.40
codegen_flags: <defaults>
</compile_context>

<pallas_src>
import functools

import jax
import jax.numpy as jnp
from jax import lax
from jax.experimental import pallas as pl
from jax.experimental.pallas import tpu as pltpu

K_SIZE = 4          # Conv2d kernel size
STRIDE = 2          # Conv2d stride
PAD = 1             # Conv2d padding
LEAKY_SLOPE = 0.2   # nn.LeakyReLU(0.2)
BN_EPS = 1e-5       # nn.BatchNorm2d default eps

VMEM_LIMIT_BYTES = 48 * 1024 * 1024   # safe on v5e/v6e/v7x (raise to ~100MiB on v5e/v6e)
TILE_VMEM_BUDGET = 40 * 1024 * 1024   # what the row-tile picker plans against
MAX_TILE_LANES = 8192                 # keep per-step moderate / grid reasonably fine


# ----------------------------- Pallas kernels ------------------------------

def _conv_stats_kernel(xt_ref, w_ref, y_ref, mean_ref, m2_ref):
    """Fused LeakyReLU + stride-2 4x4 conv (16 per-tap bf16 MXU matmuls with
    f32 accumulation) + per-tile BatchNorm partial statistics.

    xt_ref   : (1, 1, 8, Cin, (TOH+1)*OW) bf16  tap slabs ((kh%2, kw) combos),
               spatial pre-flattened so each tap read is a contiguous slice.
    w_ref    : (16, Cout, Cin)            bf16  per-tap weight matrices.
    y_ref    : (1, Cout, TOH*OW)          bf16  conv output tile (lane-dense).
    mean_ref : (1, 1, Cout, 1)            f32   per-tile channel mean.
    m2_ref   : (1, 1, Cout, 1)            f32   per-tile centered sum-of-squares.
    """
    st = y_ref.shape[2]              # TOH * OW
    ow = xt_ref.shape[4] - st        # OW   (slab has one extra boundary row)
    cout = y_ref.shape[1]

    xa = xt_ref[0, 0]                                    # (8, Cin, (TOH+1)*OW)
    xa = jnp.where(xa > 0, xa, LEAKY_SLOPE * xa)         # LeakyReLU fused (leaky(0)=0)

    acc = jnp.zeros((cout, st), jnp.float32)
    for kh in range(K_SIZE):
        for kw in range(K_SIZE):
            j = (kh % 2) * K_SIZE + kw                   # which tap slab
            rs = kh // 2                                 # row shift inside the slab
            rhs = xa[j, :, rs * ow: rs * ow + st]        # (Cin, TOH*OW), contiguous
            acc = acc + jnp.dot(w_ref[kh * K_SIZE + kw], rhs,
                                preferred_element_type=jnp.float32)

    y_ref[...] = acc[None].astype(y_ref.dtype)

    # Per-tile centered statistics, combined Chan/Welford-style in the wrapper.
    mu = jnp.mean(acc, axis=1, keepdims=True)            # (Cout, 1) f32
    d = acc - mu
    mean_ref[...] = mu[None, None]
    m2_ref[...] = jnp.sum(d * d, axis=1, keepdims=True)[None, None]


def _bn_apply_kernel(y_ref, scale_ref, shift_ref, o_ref):
    """Folded BatchNorm affine on a lane-dense (1, Cout, TILE_S) tile.

    y_ref is the bf16 intermediate; the affine runs in f32 and the final
    output is stored as f32 NCHW (already in the (N, Cout, S) layout).
    """
    o_ref[...] = y_ref[...].astype(jnp.float32) * scale_ref[...] + shift_ref[...]


# ------------------------------- glue (JAX) --------------------------------

def _tile_vmem_bytes(d, ow, cin, cout):
    """Rough double-buffered VMEM need of the conv / BN kernels for row tile d."""
    lt = (d + 1) * ow
    st = d * ow
    conv = (2 * (8 * cin * lt * 2 + cout * st * 2)    # xt + y, bf16, double-buffered
            + 2 * (16 * cout * cin * 2)               # weights, bf16
            + cout * st * 4)                          # f32 accumulator
    bn = 2 * (cout * st * (2 + 4))                    # y bf16 in + f32 out
    return max(conv, bn)


def _pick_row_tile(oh, ow, cin, cout):
    """Largest row tile that divides OH, keeps the spatial tile a multiple of
    128 lanes (unless it is the whole image), and fits the VMEM budget."""
    cands = [d for d in range(1, oh + 1)
             if oh % d == 0 and (d == oh or (d * ow) % 128 == 0)]
    best = min(cands)   # must pick something legal even if over budget
    for d in cands:
        if d * ow <= MAX_TILE_LANES and _tile_vmem_bytes(d, ow, cin, cout) <= TILE_VMEM_BUDGET:
            best = max(best, d)
    return best
    # TODO(synk): also tile Cout / output columns for extreme shapes where even
    # the smallest legal row tile exceeds the VMEM budget.


def _build_tap_slabs(x, oh, ow, row_tile):
    """(N, Cin, H, W) f32 -> (N, T, 8, Cin, (row_tile+1)*OW) bf16 tap slabs.

    slab[(kh%2)*4 + kw][ci, r, c] = x_pad[ci, 2*r + kh%2, 2*c + kw], so tap
    (kh, kw)'s contribution to output row oh comes from slab row oh + kh//2.
    Total size ~= the padded input (no 4x im2col inflation); one duplicated
    boundary row per tile keeps every BlockSpec perfectly blocked.
    """
    n, cin, _, _ = x.shape
    xp = jnp.pad(x, ((0, 0), (0, 0), (PAD, PAD), (PAD, PAD)))
    slabs = []
    for rp in range(2):
        rows = xp[:, :, rp: rp + 2 * oh + 1: 2, :]                 # (N, Cin, OH+1, W+2)
        for kw in range(K_SIZE):
            slabs.append(rows[:, :, :, kw: kw + 2 * ow - 1: 2])    # (N, Cin, OH+1, OW)
    slabs = jnp.stack(slabs, axis=1)                               # (N, 8, Cin, OH+1, OW)

    t = oh // row_tile
    row_ids = row_tile * jnp.arange(t)[:, None] + jnp.arange(row_tile + 1)[None, :]
    tiles = slabs[:, :, :, row_ids, :]                 # (N, 8, Cin, T, row_tile+1, OW)
    tiles = jnp.moveaxis(tiles, 3, 1)                  # (N, T, 8, Cin, row_tile+1, OW)
    return tiles.reshape(n, t, 8, cin, (row_tile + 1) * ow).astype(jnp.bfloat16)


@functools.partial(jax.jit, static_argnames=("row_tile",))
def unet_skip_down_forward(x, w_conv, gamma, beta, row_tile=None):
    """x: (N, input_nc, H, W) NCHW f32; w_conv: (inner_nc, input_nc, 4, 4)
    PyTorch OIHW; returns BatchNorm2d(Conv2d(LeakyReLU(x, 0.2))) as
    (N, inner_nc, H//2, W//2) NCHW f32."""
    n, cin, h, w = x.shape
    assert h % STRIDE == 0 and w % STRIDE == 0, "UNet down block expects even H, W"
    cout = w_conv.shape[0]
    oh, ow = h // STRIDE, w // STRIDE
    s = oh * ow

    # Pad Cin to a multiple of 8 with zero channels (exact: 0-weight x 0-input).
    pad_c = (-cin) % 8
    if pad_c:
        x = jnp.pad(x, ((0, 0), (0, pad_c), (0, 0), (0, 0)))
        w_conv = jnp.pad(w_conv, ((0, 0), (0, pad_c), (0, 0), (0, 0)))
    cin_p = cin + pad_c

    if row_tile is None:
        row_tile = _pick_row_tile(oh, ow, cin_p, cout)
    assert oh % row_tile == 0, "row_tile must divide OH"
    assert row_tile == oh or (row_tile * ow) % 128 == 0, \
        "tiled spatial extent must be a multiple of 128 lanes"
    t = oh // row_tile
    st = row_tile * ow
    lt = (row_tile + 1) * ow
    grid = (t, n)          # fine-grained axis first: better v7x megacore balance

    # ~1x-sized bf16 tap slabs (replaces the 4x f32 im2col HBM slab).
    xt = _build_tap_slabs(x, oh, ow, row_tile)          # (N, T, 8, Cin_p, lt)

    # (16, Cout, Cin) per-tap weight matrices, tap index = kh*4 + kw, bf16.
    w_taps = jnp.transpose(w_conv, (2, 3, 0, 1)).reshape(
        K_SIZE * K_SIZE, cout, cin_p).astype(jnp.bfloat16)

    cparams = pltpu.CompilerParams(
        dimension_semantics=("parallel", "parallel"),
        vmem_limit_bytes=VMEM_LIMIT_BYTES)

    y, tile_mean, tile_m2 = pl.pallas_call(
        _conv_stats_kernel,
        out_shape=(jax.ShapeDtypeStruct((n, cout, s), jnp.bfloat16),
                   jax.ShapeDtypeStruct((t, n, cout, 1), jnp.float32),
                   jax.ShapeDtypeStruct((t, n, cout, 1), jnp.float32)),
        grid_spec=pltpu.PrefetchScalarGridSpec(
            num_scalar_prefetch=0,
            grid=grid,
            in_specs=[pl.BlockSpec((1, 1, 8, cin_p, lt),
                                   lambda ti, ni: (ni, ti, 0, 0, 0)),
                      pl.BlockSpec((K_SIZE * K_SIZE, cout, cin_p),
                                   lambda ti, ni: (0, 0, 0))],
            out_specs=(pl.BlockSpec((1, cout, st), lambda ti, ni: (ni, 0, ti)),
                       pl.BlockSpec((1, 1, cout, 1), lambda ti, ni: (ti, ni, 0, 0)),
                       pl.BlockSpec((1, 1, cout, 1), lambda ti, ni: (ti, ni, 0, 0)))),
        compiler_params=cparams,
    )(xt, w_taps)

    # Combine per-tile (mean, M2) in f32 (equal per-tile counts), then fold
    # BatchNorm (training-mode batch stats, biased variance) into one affine.
    m_tile = jnp.float32(st)
    tmean = tile_mean[..., 0]                          # (T, N, Cout)
    tm2 = tile_m2[..., 0]
    gmean = jnp.mean(tmean, axis=(0, 1))               # (Cout,)
    within = jnp.sum(tm2, axis=(0, 1))
    between = m_tile * jnp.sum((tmean - gmean) ** 2, axis=(0, 1))
    var = (within + between) / jnp.float32(n * s)      # biased, like PyTorch BN
    inv_std = lax.rsqrt(var + BN_EPS)
    scale = (gamma * inv_std).reshape(1, cout, 1).astype(jnp.float32)
    shift = (beta - gmean * gamma * inv_std).reshape(1, cout, 1).astype(jnp.float32)

    out = pl.pallas_call(
        _bn_apply_kernel,
        out_shape=jax.ShapeDtypeStruct((n, cout, s), jnp.float32),
        grid_spec=pltpu.PrefetchScalarGridSpec(
            num_scalar_prefetch=0,
            grid=grid,
            in_specs=[pl.BlockSpec((1, cout, st), lambda ti, ni: (ni, 0, ti)),
                      pl.BlockSpec((1, cout, 1), lambda ti, ni: (0, 0, 0)),
                      pl.BlockSpec((1, cout, 1), lambda ti, ni: (0, 0, 0))],
            out_specs=pl.BlockSpec((1, cout, st), lambda ti, ni: (ni, 0, ti))),
        compiler_params=cparams,
    )(y, scale, shift)

    # (N, Cout, S) -> (N, Cout, OH, OW): metadata-only reshape, already NCHW.
    return out.reshape(n, cout, oh, ow)


# ---------------------------- pure-JAX reference ---------------------------

def _reference(x, w, gamma, beta):
    y = jnp.where(x > 0, x, LEAKY_SLOPE * x)
    y = lax.conv_general_dilated(
        y, w, window_strides=(STRIDE, STRIDE),
        padding=[(PAD, PAD), (PAD, PAD)],
        dimension_numbers=('NCHW', 'OIHW', 'NCHW'))
    mean = y.mean(axis=(0, 2, 3), keepdims=True)
    var = y.var(axis=(0, 2, 3), keepdims=True)          # biased, like PyTorch BN
    y = (y - mean) * lax.rsqrt(var + BN_EPS)
    return y * gamma.reshape(1, -1, 1, 1) + beta.reshape(1, -1, 1, 1)


# ----------------------------------- main -----------------------------------

if __name__ == "__main__":
    key = jax.random.PRNGKey(0)
    kx, kwt, kg, kb = jax.random.split(key, 4)

    outer_nc, inner_nc = 4, 8      # input_nc defaults to outer_nc in the module
    n, h, w = 2, 32, 32

    x = jax.random.normal(kx, (n, outer_nc, h, w), jnp.float32)
    w_conv = 0.02 * jax.random.normal(
        kwt, (inner_nc, outer_nc, K_SIZE, K_SIZE), jnp.float32)   # PyTorch OIHW
    gamma = 1.0 + 0.1 * jax.random.normal(kg, (inner_nc,), jnp.float32)
    beta = 0.1 * jax.random.normal(kb, (inner_nc,), jnp.float32)

    ref = _reference(x, w_conv, gamma, beta)
    # bf16 MXU operands -> compare against the f32 reference at bf16-level tolerance.
    tol = dict(rtol=3e-2, atol=3e-2)

    # Auto tile choice (whole image per grid step at this small size).
    out = jax.block_until_ready(unet_skip_down_forward(x, w_conv, gamma, beta))
    assert out.shape == (n, inner_nc, h // STRIDE, w // STRIDE), out.shape
    assert jnp.allclose(out, ref, **tol), float(jnp.max(jnp.abs(out - ref)))

    # Forced row tiling (T=2, 128-lane tiles) to exercise the tiled path and
    # the cross-tile BatchNorm statistics combination.
    out_tiled = jax.block_until_ready(
        unet_skip_down_forward(x, w_conv, gamma, beta, row_tile=8))
    assert jnp.allclose(out_tiled, ref, **tol), float(jnp.max(jnp.abs(out_tiled - ref)))

    print("KERNEL_OK")
</pallas_src>

<mosaic_0001>
module attributes {stable_mosaic.version = 11 : i64} {
  func.func @_conv_stats_kernel(%arg0: i32, %arg1: i32, %arg2: memref<1x1x8x8x272xbf16, #tpu.memory_space<vmem>>, %arg3: memref<16x8x8xbf16, #tpu.memory_space<vmem>>, %arg4: memref<1x8x256xbf16, #tpu.memory_space<vmem>>, %arg5: memref<1x1x8x1xf32, #tpu.memory_space<vmem>>, %arg6: memref<1x1x8x1xf32, #tpu.memory_space<vmem>>) attributes {dimension_semantics = [#tpu.dimension_semantics<parallel>, #tpu.dimension_semantics<parallel>], iteration_bounds = array<i64: 1, 2>, scalar_prefetch = 0 : i64, scratch_operands = 0 : i64, tpu.core_type = #tpu.core_type<tc>, window_params = [{transform_indices = @transform_0, window_bounds = array<i64: 1, 1, 8, 8, 272>}, {pipeline_mode = #tpu.pipeline_mode<synchronous>, transform_indices = @transform_1, window_bounds = array<i64: 16, 8, 8>}, {transform_indices = @transform_2, window_bounds = array<i64: 1, 8, 256>}, {transform_indices = @transform_3, window_bounds = array<i64: 1, 1, 8, 1>}, {transform_indices = @transform_4, window_bounds = array<i64: 1, 1, 8, 1>}]} {
    %c0 = arith.constant 0 : index
    %c0_0 = arith.constant 0 : index
    %c0_1 = arith.constant 0 : index
    %c0_2 = arith.constant 0 : index
    %c0_3 = arith.constant 0 : index
    %0 = vector.load %arg2[%c0, %c0_0, %c0_1, %c0_2, %c0_3] : memref<1x1x8x8x272xbf16, #tpu.memory_space<vmem>>, vector<1x1x8x8x272xbf16>
    %1 = vector.shape_cast %0 : vector<1x1x8x8x272xbf16> to vector<8x8x272xbf16>
    %cst = arith.constant 0.000000e+00 : bf16
    %2 = vector.broadcast %cst : bf16 to vector<8x8x272xbf16>
    %3 = arith.cmpf ogt, %1, %2 : vector<8x8x272xbf16>
    %cst_4 = arith.constant 2.001950e-01 : bf16
    %4 = vector.broadcast %cst_4 : bf16 to vector<8x8x272xbf16>
    %5 = arith.mulf %4, %1 : vector<8x8x272xbf16>
    %6 = arith.select %3, %1, %5 : vector<8x8x272xi1>, vector<8x8x272xbf16>
    %cst_5 = arith.constant 0.000000e+00 : f32
    %7 = vector.broadcast %cst_5 : f32 to vector<8x256xf32>
    %8 = vector.extract_strided_slice %6 {offsets = [0, 0, 0], sizes = [1, 8, 256], strides = [1, 1, 1]} : vector<8x8x272xbf16> to vector<1x8x256xbf16>
    %9 = vector.shape_cast %8 : vector<1x8x256xbf16> to vector<8x256xbf16>
    %c0_6 = arith.constant 0 : index
    %c0_7 = arith.constant 0 : index
    %c0_8 = arith.constant 0 : index
    %10 = vector.load %arg3[%c0_6, %c0_7, %c0_8] : memref<16x8x8xbf16, #tpu.memory_space<vmem>>, vector<1x8x8xbf16>
    %11 = vector.shape_cast %10 : vector<1x8x8xbf16> to vector<8x8xbf16>
    %cst_9 = arith.constant dense<0.000000e+00> : vector<8x256xf32>
    %12 = tpu.matmul %11, %9, %cst_9 {dimension_numbers = #tpu.dot_dimension_numbers<[1], [0], [0], [1], [0, 0, 1, 1], [], []>} : vector<8x8xbf16>, vector<8x256xbf16>, vector<8x256xf32> -> vector<8x256xf32>
    %13 = arith.addf %7, %12 : vector<8x256xf32>
    %14 = vector.extract_strided_slice %6 {offsets = [1, 0, 0], sizes = [1, 8, 256], strides = [1, 1, 1]} : vector<8x8x272xbf16> to vector<1x8x256xbf16>
    %15 = vector.shape_cast %14 : vector<1x8x256xbf16> to vector<8x256xbf16>
    %c1 = arith.constant 1 : index
    %c0_10 = arith.constant 0 : index
    %c0_11 = arith.constant 0 : index
    %16 = vector.load %arg3[%c1, %c0_10, %c0_11] : memref<16x8x8xbf16, #tpu.memory_space<vmem>>, vector<1x8x8xbf16>
    %17 = vector.shape_cast %16 : vector<1x8x8xbf16> to vector<8x8xbf16>
    %cst_12 = arith.constant dense<0.000000e+00> : vector<8x256xf32>
    %18 = tpu.matmul %17, %15, %cst_12 {dimension_numbers = #tpu.dot_dimension_numbers<[1], [0], [0], [1], [0, 0, 1, 1], [], []>} : vector<8x8xbf16>, vector<8x256xbf16>, vector<8x256xf32> -> vector<8x256xf32>
    %19 = arith.addf %13, %18 : vector<8x256xf32>
    %20 = vector.extract_strided_slice %6 {offsets = [2, 0, 0], sizes = [1, 8, 256], strides = [1, 1, 1]} : vector<8x8x272xbf16> to vector<1x8x256xbf16>
    %21 = vector.shape_cast %20 : vector<1x8x256xbf16> to vector<8x256xbf16>
    %c2 = arith.constant 2 : index
    %c0_13 = arith.constant 0 : index
    %c0_14 = arith.constant 0 : index
    %22 = vector.load %arg3[%c2, %c0_13, %c0_14] : memref<16x8x8xbf16, #tpu.memory_space<vmem>>, vector<1x8x8xbf16>
    %23 = vector.shape_cast %22 : vector<1x8x8xbf16> to vector<8x8xbf16>
    %cst_15 = arith.constant dense<0.000000e+00> : vector<8x256xf32>
    %24 = tpu.matmul %23, %21, %cst_15 {dimension_numbers = #tpu.dot_dimension_numbers<[1], [0], [0], [1], [0, 0, 1, 1], [], []>} : vector<8x8xbf16>, vector<8x256xbf16>, vector<8x256xf32> -> vector<8x256xf32>
    %25 = arith.addf %19, %24 : vector<8x256xf32>
    %26 = vector.extract_strided_slice %6 {offsets = [3, 0, 0], sizes = [1, 8, 256], strides = [1, 1, 1]} : vector<8x8x272xbf16> to vector<1x8x256xbf16>
    %27 = vector.shape_cast %26 : vector<1x8x256xbf16> to vector<8x256xbf16>
    %c3 = arith.constant 3 : index
    %c0_16 = arith.constant 0 : index
    %c0_17 = arith.constant 0 : index
    %28 = vector.load %arg3[%c3, %c0_16, %c0_17] : memref<16x8x8xbf16, #tpu.memory_space<vmem>>, vector<1x8x8xbf16>
    %29 = vector.shape_cast %28 : vector<1x8x8xbf16> to vector<8x8xbf16>
    %cst_18 = arith.constant dense<0.000000e+00> : vector<8x256xf32>
    %30 = tpu.matmul %29, %27, %cst_18 {dimension_numbers = #tpu.dot_dimension_numbers<[1], [0], [0], [1], [0, 0, 1, 1], [], []>} : vector<8x8xbf16>, vector<8x256xbf16>, vector<8x256xf32> -> vector<8x256xf32>
    %31 = arith.addf %25, %30 : vector<8x256xf32>
    %32 = vector.extract_strided_slice %6 {offsets = [4, 0, 0], sizes = [1, 8, 256], strides = [1, 1, 1]} : vector<8x8x272xbf16> to vector<1x8x256xbf16>
    %33 = vector.shape_cast %32 : vector<1x8x256xbf16> to vector<8x256xbf16>
    %c4 = arith.constant 4 : index
    %c0_19 = arith.constant 0 : index
    %c0_20 = arith.constant 0 : index
    %34 = vector.load %arg3[%c4, %c0_19, %c0_20] : memref<16x8x8xbf16, #tpu.memory_space<vmem>>, vector<1x8x8xbf16>
    %35 = vector.shape_cast %34 : vector<1x8x8xbf16> to vector<8x8xbf16>
    %cst_21 = arith.constant dense<0.000000e+00> : vector<8x256xf32>
    %36 = tpu.matmul %35, %33, %cst_21 {dimension_numbers = #tpu.dot_dimension_numbers<[1], [0], [0], [1], [0, 0, 1, 1], [], []>} : vector<8x8xbf16>, vector<8x256xbf16>, vector<8x256xf32> -> vector<8x256xf32>
    %37 = arith.addf %31, %36 : vector<8x256xf32>
    %38 = vector.extract_strided_slice %6 {offsets = [5, 0, 0], sizes = [1, 8, 256], strides = [1, 1, 1]} : vector<8x8x272xbf16> to vector<1x8x256xbf16>
    %39 = vector.shape_cast %38 : vector<1x8x256xbf16> to vector<8x256xbf16>
    %c5 = arith.constant 5 : index
    %c0_22 = arith.constant 0 : index
    %c0_23 = arith.constant 0 : index
    %40 = vector.load %arg3[%c5, %c0_22, %c0_23] : memref<16x8x8xbf16, #tpu.memory_space<vmem>>, vector<1x8x8xbf16>
    %41 = vector.shape_cast %40 : vector<1x8x8xbf16> to vector<8x8xbf16>
    %cst_24 = arith.constant dense<0.000000e+00> : vector<8x256xf32>
    %42 = tpu.matmul %41, %39, %cst_24 {dimension_numbers = #tpu.dot_dimension_numbers<[1], [0], [0], [1], [0, 0, 1, 1], [], []>} : vector<8x8xbf16>, vector<8x256xbf16>, vector<8x256xf32> -> vector<8x256xf32>
    %43 = arith.addf %37, %42 : vector<8x256xf32>
    %44 = vector.extract_strided_slice %6 {offsets = [6, 0, 0], sizes = [1, 8, 256], strides = [1, 1, 1]} : vector<8x8x272xbf16> to vector<1x8x256xbf16>
    %45 = vector.shape_cast %44 : vector<1x8x256xbf16> to vector<8x256xbf16>
    %c6 = arith.constant 6 : index
    %c0_25 = arith.constant 0 : index
    %c0_26 = arith.constant 0 : index
    %46 = vector.load %arg3[%c6, %c0_25, %c0_26] : memref<16x8x8xbf16, #tpu.memory_space<vmem>>, vector<1x8x8xbf16>
    %47 = vector.shape_cast %46 : vector<1x8x8xbf16> to vector<8x8xbf16>
    %cst_27 = arith.constant dense<0.000000e+00> : vector<8x256xf32>
    %48 = tpu.matmul %47, %45, %cst_27 {dimension_numbers = #tpu.dot_dimension_numbers<[1], [0], [0], [1], [0, 0, 1, 1], [], []>} : vector<8x8xbf16>, vector<8x256xbf16>, vector<8x256xf32> -> vector<8x256xf32>
    %49 = arith.addf %43, %48 : vector<8x256xf32>
    %50 = vector.extract_strided_slice %6 {offsets = [7, 0, 0], sizes = [1, 8, 256], strides = [1, 1, 1]} : vector<8x8x272xbf16> to vector<1x8x256xbf16>
    %51 = vector.shape_cast %50 : vector<1x8x256xbf16> to vector<8x256xbf16>
    %c7 = arith.constant 7 : index
    %c0_28 = arith.constant 0 : index
    %c0_29 = arith.constant 0 : index
    %52 = vector.load %arg3[%c7, %c0_28, %c0_29] : memref<16x8x8xbf16, #tpu.memory_space<vmem>>, vector<1x8x8xbf16>
    %53 = vector.shape_cast %52 : vector<1x8x8xbf16> to vector<8x8xbf16>
    %cst_30 = arith.constant dense<0.000000e+00> : vector<8x256xf32>
    %54 = tpu.matmul %53, %51, %cst_30 {dimension_numbers = #tpu.dot_dimension_numbers<[1], [0], [0], [1], [0, 0, 1, 1], [], []>} : vector<8x8xbf16>, vector<8x256xbf16>, vector<8x256xf32> -> vector<8x256xf32>
    %55 = arith.addf %49, %54 : vector<8x256xf32>
    %56 = vector.extract_strided_slice %6 {offsets = [0, 0, 16], sizes = [1, 8, 256], strides = [1, 1, 1]} : vector<8x8x272xbf16> to vector<1x8x256xbf16>
    %57 = vector.shape_cast %56 : vector<1x8x256xbf16> to vector<8x256xbf16>
    %c8 = arith.constant 8 : index
    %c0_31 = arith.constant 0 : index
    %c0_32 = arith.constant 0 : index
    %58 = vector.load %arg3[%c8, %c0_31, %c0_32] : memref<16x8x8xbf16, #tpu.memory_space<vmem>>, vector<1x8x8xbf16>
    %59 = vector.shape_cast %58 : vector<1x8x8xbf16> to vector<8x8xbf16>
    %cst_33 = arith.constant dense<0.000000e+00> : vector<8x256xf32>
    %60 = tpu.matmul %59, %57, %cst_33 {dimension_numbers = #tpu.dot_dimension_numbers<[1], [0], [0], [1], [0, 0, 1, 1], [], []>} : vector<8x8xbf16>, vector<8x256xbf16>, vector<8x256xf32> -> vector<8x256xf32>
    %61 = arith.addf %55, %60 : vector<8x256xf32>
    %62 = vector.extract_strided_slice %6 {offsets = [1, 0, 16], sizes = [1, 8, 256], strides = [1, 1, 1]} : vector<8x8x272xbf16> to vector<1x8x256xbf16>
    %63 = vector.shape_cast %62 : vector<1x8x256xbf16> to vector<8x256xbf16>
    %c9 = arith.constant 9 : index
    %c0_34 = arith.constant 0 : index
    %c0_35 = arith.constant 0 : index
    %64 = vector.load %arg3[%c9, %c0_34, %c0_35] : memref<16x8x8xbf16, #tpu.memory_space<vmem>>, vector<1x8x8xbf16>
    %65 = vector.shape_cast %64 : vector<1x8x8xbf16> to vector<8x8xbf16>
    %cst_36 = arith.constant dense<0.000000e+00> : vector<8x256xf32>
    %66 = tpu.matmul %65, %63, %cst_36 {dimension_numbers = #tpu.dot_dimension_numbers<[1], [0], [0], [1], [0, 0, 1, 1], [], []>} : vector<8x8xbf16>, vector<8x256xbf16>, vector<8x256xf32> -> vector<8x256xf32>
    %67 = arith.addf %61, %66 : vector<8x256xf32>
    %68 = vector.extract_strided_slice %6 {offsets = [2, 0, 16], sizes = [1, 8, 256], strides = [1, 1, 1]} : vector<8x8x272xbf16> to vector<1x8x256xbf16>
    %69 = vector.shape_cast %68 : vector<1x8x256xbf16> to vector<8x256xbf16>
    %c10 = arith.constant 10 : index
    %c0_37 = arith.constant 0 : index
    %c0_38 = arith.constant 0 : index
    %70 = vector.load %arg3[%c10, %c0_37, %c0_38] : memref<16x8x8xbf16, #tpu.memory_space<vmem>>, vector<1x8x8xbf16>
    %71 = vector.shape_cast %70 : vector<1x8x8xbf16> to vector<8x8xbf16>
    %cst_39 = arith.constant dense<0.000000e+00> : vector<8x256xf32>
    %72 = tpu.matmul %71, %69, %cst_39 {dimension_numbers = #tpu.dot_dimension_numbers<[1], [0], [0], [1], [0, 0, 1, 1], [], []>} : vector<8x8xbf16>, vector<8x256xbf16>, vector<8x256xf32> -> vector<8x256xf32>
    %73 = arith.addf %67, %72 : vector<8x256xf32>
    %74 = vector.extract_strided_slice %6 {offsets = [3, 0, 16], sizes = [1, 8, 256], strides = [1, 1, 1]} : vector<8x8x272xbf16> to vector<1x8x256xbf16>
    %75 = vector.shape_cast %74 : vector<1x8x256xbf16> to vector<8x256xbf16>
    %c11 = arith.constant 11 : index
    %c0_40 = arith.constant 0 : index
    %c0_41 = arith.constant 0 : index
    %76 = vector.load %arg3[%c11, %c0_40, %c0_41] : memref<16x8x8xbf16, #tpu.memory_space<vmem>>, vector<1x8x8xbf16>
    %77 = vector.shape_cast %76 : vector<1x8x8xbf16> to vector<8x8xbf16>
    %cst_42 = arith.constant dense<0.000000e+00> : vector<8x256xf32>
    %78 = tpu.matmul %77, %75, %cst_42 {dimension_numbers = #tpu.dot_dimension_numbers<[1], [0], [0], [1], [0, 0, 1, 1], [], []>} : vector<8x8xbf16>, vector<8x256xbf16>, vector<8x256xf32> -> vector<8x256xf32>
    %79 = arith.addf %73, %78 : vector<8x256xf32>
    %80 = vector.extract_strided_slice %6 {offsets = [4, 0, 16], sizes = [1, 8, 256], strides = [1, 1, 1]} : vector<8x8x272xbf16> to vector<1x8x256xbf16>
    %81 = vector.shape_cast %80 : vector<1x8x256xbf16> to vector<8x256xbf16>
    %c12 = arith.constant 12 : index
    %c0_43 = arith.constant 0 : index
    %c0_44 = arith.constant 0 : index
    %82 = vector.load %arg3[%c12, %c0_43, %c0_44] : memref<16x8x8xbf16, #tpu.memory_space<vmem>>, vector<1x8x8xbf16>
    %83 = vector.shape_cast %82 : vector<1x8x8xbf16> to vector<8x8xbf16>
    %cst_45 = arith.constant dense<0.000000e+00> : vector<8x256xf32>
    %84 = tpu.matmul %83, %81, %cst_45 {dimension_numbers = #tpu.dot_dimension_numbers<[1], [0], [0], [1], [0, 0, 1, 1], [], []>} : vector<8x8xbf16>, vector<8x256xbf16>, vector<8x256xf32> -> vector<8x256xf32>
    %85 = arith.addf %79, %84 : vector<8x256xf32>
    %86 = vector.extract_strided_slice %6 {offsets = [5, 0, 16], sizes = [1, 8, 256], strides = [1, 1, 1]} : vector<8x8x272xbf16> to vector<1x8x256xbf16>
    %87 = vector.shape_cast %86 : vector<1x8x256xbf16> to vector<8x256xbf16>
    %c13 = arith.constant 13 : index
    %c0_46 = arith.constant 0 : index
    %c0_47 = arith.constant 0 : index
    %88 = vector.load %arg3[%c13, %c0_46, %c0_47] : memref<16x8x8xbf16, #tpu.memory_space<vmem>>, vector<1x8x8xbf16>
    %89 = vector.shape_cast %88 : vector<1x8x8xbf16> to vector<8x8xbf16>
    %cst_48 = arith.constant dense<0.000000e+00> : vector<8x256xf32>
    %90 = tpu.matmul %89, %87, %cst_48 {dimension_numbers = #tpu.dot_dimension_numbers<[1], [0], [0], [1], [0, 0, 1, 1], [], []>} : vector<8x8xbf16>, vector<8x256xbf16>, vector<8x256xf32> -> vector<8x256xf32>
    %91 = arith.addf %85, %90 : vector<8x256xf32>
    %92 = vector.extract_strided_slice %6 {offsets = [6, 0, 16], sizes = [1, 8, 256], strides = [1, 1, 1]} : vector<8x8x272xbf16> to vector<1x8x256xbf16>
    %93 = vector.shape_cast %92 : vector<1x8x256xbf16> to vector<8x256xbf16>
    %c14 = arith.constant 14 : index
    %c0_49 = arith.constant 0 : index
    %c0_50 = arith.constant 0 : index
    %94 = vector.load %arg3[%c14, %c0_49, %c0_50] : memref<16x8x8xbf16, #tpu.memory_space<vmem>>, vector<1x8x8xbf16>
    %95 = vector.shape_cast %94 : vector<1x8x8xbf16> to vector<8x8xbf16>
    %cst_51 = arith.constant dense<0.000000e+00> : vector<8x256xf32>
    %96 = tpu.matmul %95, %93, %cst_51 {dimension_numbers = #tpu.dot_dimension_numbers<[1], [0], [0], [1], [0, 0, 1, 1], [], []>} : vector<8x8xbf16>, vector<8x256xbf16>, vector<8x256xf32> -> vector<8x256xf32>
    %97 = arith.addf %91, %96 : vector<8x256xf32>
    %98 = vector.extract_strided_slice %6 {offsets = [7, 0, 16], sizes = [1, 8, 256], strides = [1, 1, 1]} : vector<8x8x272xbf16> to vector<1x8x256xbf16>
    %99 = vector.shape_cast %98 : vector<1x8x256xbf16> to vector<8x256xbf16>
    %c15 = arith.constant 15 : index
    %c0_52 = arith.constant 0 : index
    %c0_53 = arith.constant 0 : index
    %100 = vector.load %arg3[%c15, %c0_52, %c0_53] : memref<16x8x8xbf16, #tpu.memory_space<vmem>>, vector<1x8x8xbf16>
    %101 = vector.shape_cast %100 : vector<1x8x8xbf16> to vector<8x8xbf16>
    %cst_54 = arith.constant dense<0.000000e+00> : vector<8x256xf32>
    %102 = tpu.matmul %101, %99, %cst_54 {dimension_numbers = #tpu.dot_dimension_numbers<[1], [0], [0], [1], [0, 0, 1, 1], [], []>} : vector<8x8xbf16>, vector<8x256xbf16>, vector<8x256xf32> -> vector<8x256xf32>
    %103 = arith.addf %97, %102 : vector<8x256xf32>
    %104 = vector.shape_cast %103 : vector<8x256xf32> to vector<1x8x256xf32>
    %105 = arith.truncf %104 : vector<1x8x256xf32> to vector<1x8x256xbf16>
    %c0_55 = arith.constant 0 : index
    %c0_56 = arith.constant 0 : index
    %c0_57 = arith.constant 0 : index
    %106 = vector.load %arg4[%c0_55, %c0_56, %c0_57] : memref<1x8x256xbf16, #tpu.memory_space<vmem>>, vector<1x8x256xbf16>
    tpu.vector_store %arg4[%c0_55, %c0_56, %c0_57], %105 {strides = array<i32>} : memref<1x8x256xbf16, #tpu.memory_space<vmem>>, vector<1x8x256xbf16>,
    %cst_58 = arith.constant dense<0.000000e+00> : vector<8xf32>
    %107 = vector.multi_reduction <add>, %103, %cst_58 [1] : vector<8x256xf32> to vector<8xf32>
    %108 = vector.shape_cast %107 : vector<8xf32> to vector<8x1xf32>
    %cst_59 = arith.constant 2.560000e+02 : f32
    %109 = vector.broadcast %cst_59 : f32 to vector<8x1xf32>
    %110 = arith.divf %108, %109 : vector<8x1xf32>
    %111 = vector.broadcast %110 : vector<8x1xf32> to vector<8x256xf32>
    %112 = arith.subf %103, %111 : vector<8x256xf32>
    %113 = vector.shape_cast %110 : vector<8x1xf32> to vector<1x1x8x1xf32>
    %c0_60 = arith.constant 0 : index
    %c0_61 = arith.constant 0 : index
    %c0_62 = arith.constant 0 : index
    %c0_63 = arith.constant 0 : index
    %114 = vector.load %arg5[%c0_60, %c0_61, %c0_62, %c0_63] : memref<1x1x8x1xf32, #tpu.memory_space<vmem>>, vector<1x1x8x1xf32>
    tpu.vector_store %arg5[%c0_60, %c0_61, %c0_62, %c0_63], %113 {strides = array<i32>} : memref<1x1x8x1xf32, #tpu.memory_space<vmem>>, vector<1x1x8x1xf32>,
    %115 = arith.mulf %112, %112 : vector<8x256xf32>
    %cst_64 = arith.constant dense<0.000000e+00> : vector<8xf32>
    %116 = vector.multi_reduction <add>, %115, %cst_64 [1] : vector<8x256xf32> to vector<8xf32>
    %117 = vector.shape_cast %116 : vector<8xf32> to vector<8x1xf32>
    %118 = vector.shape_cast %117 : vector<8x1xf32> to vector<1x1x8x1xf32>
    %c0_65 = arith.constant 0 : index
    %c0_66 = arith.constant 0 : index
    %c0_67 = arith.constant 0 : index
    %c0_68 = arith.constant 0 : index
    %119 = vector.load %arg6[%c0_65, %c0_66, %c0_67, %c0_68] : memref<1x1x8x1xf32, #tpu.memory_space<vmem>>, vector<1x1x8x1xf32>
    tpu.vector_store %arg6[%c0_65, %c0_66, %c0_67, %c0_68], %118 {strides = array<i32>} : memref<1x1x8x1xf32, #tpu.memory_space<vmem>>, vector<1x1x8x1xf32>,
    return
  }
  func.func @transform_0(%arg0: i32, %arg1: i32) -> (i32, i32, i32, i32, i32) {
    %c0_i32 = arith.constant 0 : i32
    %c0_i32_0 = arith.constant 0 : i32
    %c0_i32_1 = arith.constant 0 : i32
    %c0_i32_2 = arith.constant 0 : i32
    return %arg1, %arg0, %c0_i32, %c0_i32_0, %c0_i32_1 : i32, i32, i32, i32, i32
  }
  func.func @transform_1(%arg0: i32, %arg1: i32) -> (i32, i32, i32) {
    %c0_i32 = arith.constant 0 : i32
    %c0_i32_0 = arith.constant 0 : i32
    %c0_i32_1 = arith.constant 0 : i32
    %c0_i32_2 = arith.constant 0 : i32
    return %c0_i32, %c0_i32_0, %c0_i32_1 : i32, i32, i32
  }
  func.func @transform_2(%arg0: i32, %arg1: i32) -> (i32, i32, i32) {
    %c0_i32 = arith.constant 0 : i32
    %c0_i32_0 = arith.constant 0 : i32
    return %arg1, %c0_i32, %arg0 : i32, i32, i32
  }
  func.func @transform_3(%arg0: i32, %arg1: i32) -> (i32, i32, i32, i32) {
    %c0_i32 = arith.constant 0 : i32
    %c0_i32_0 = arith.constant 0 : i32
    %c0_i32_1 = arith.constant 0 : i32
    return %arg0, %arg1, %c0_i32, %c0_i32_0 : i32, i32, i32, i32
  }
  func.func @transform_4(%arg0: i32, %arg1: i32) -> (i32, i32, i32, i32) {
    %c0_i32 = arith.constant 0 : i32
    %c0_i32_0 = arith.constant 0 : i32
    %c0_i32_1 = arith.constant 0 : i32
    return %arg0, %arg1, %c0_i32, %c0_i32_0 : i32, i32, i32, i32
  }
}

module attributes {stable_mosaic.version = 11 : i64} {
  func.func @_bn_apply_kernel(%arg0: i32, %arg1: i32, %arg2: memref<1x8x256xbf16, #tpu.memory_space<vmem>>, %arg3: memref<1x8x1xf32, #tpu.memory_space<vmem>>, %arg4: memref<1x8x1xf32, #tpu.memory_space<vmem>>, %arg5: memref<1x8x256xf32, #tpu.memory_space<vmem>>) attributes {dimension_semantics = [#tpu.dimension_semantics<parallel>, #tpu.dimension_semantics<parallel>], iteration_bounds = array<i64: 1, 2>, scalar_prefetch = 0 : i64, scratch_operands = 0 : i64, tpu.core_type = #tpu.core_type<tc>, window_params = [{transform_indices = @transform_0, window_bounds = array<i64: 1, 8, 256>}, {pipeline_mode = #tpu.pipeline_mode<synchronous>, transform_indices = @transform_1, window_bounds = array<i64: 1, 8, 1>}, {pipeline_mode = #tpu.pipeline_mode<synchronous>, transform_indices = @transform_2, window_bounds = array<i64: 1, 8, 1>}, {transform_indices = @transform_3, window_bounds = array<i64: 1, 8, 256>}]} {
    %c0 = arith.constant 0 : index
    %c0_0 = arith.constant 0 : index
    %c0_1 = arith.constant 0 : index
    %0 = vector.load %arg2[%c0, %c0_0, %c0_1] : memref<1x8x256xbf16, #tpu.memory_space<vmem>>, vector<1x8x256xbf16>
    %1 = arith.extf %0 : vector<1x8x256xbf16> to vector<1x8x256xf32>
    %c0_2 = arith.constant 0 : index
    %c0_3 = arith.constant 0 : index
    %c0_4 = arith.constant 0 : index
    %2 = vector.load %arg3[%c0_2, %c0_3, %c0_4] : memref<1x8x1xf32, #tpu.memory_space<vmem>>, vector<1x8x1xf32>
    %3 = vector.broadcast %2 : vector<1x8x1xf32> to vector<1x8x256xf32>
    %4 = arith.mulf %1, %3 : vector<1x8x256xf32>
    %c0_5 = arith.constant 0 : index
    %c0_6 = arith.constant 0 : index
    %c0_7 = arith.constant 0 : index
    %5 = vector.load %arg4[%c0_5, %c0_6, %c0_7] : memref<1x8x1xf32, #tpu.memory_space<vmem>>, vector<1x8x1xf32>
    %6 = vector.broadcast %5 : vector<1x8x1xf32> to vector<1x8x256xf32>
    %7 = arith.addf %4, %6 : vector<1x8x256xf32>
    %c0_8 = arith.constant 0 : index
    %c0_9 = arith.constant 0 : index
    %c0_10 = arith.constant 0 : index
    %8 = vector.load %arg5[%c0_8, %c0_9, %c0_10] : memref<1x8x256xf32, #tpu.memory_space<vmem>>, vector<1x8x256xf32>
    tpu.vector_store %arg5[%c0_8, %c0_9, %c0_10], %7 {strides = array<i32>} : memref<1x8x256xf32, #tpu.memory_space<vmem>>, vector<1x8x256xf32>,
    return
  }
  func.func @transform_0(%arg0: i32, %arg1: i32) -> (i32, i32, i32) {
    %c0_i32 = arith.constant 0 : i32
    %c0_i32_0 = arith.constant 0 : i32
    return %arg1, %c0_i32, %arg0 : i32, i32, i32
  }
  func.func @transform_1(%arg0: i32, %arg1: i32) -> (i32, i32, i32) {
    %c0_i32 = arith.constant 0 : i32
    %c0_i32_0 = arith.constant 0 : i32
    %c0_i32_1 = arith.constant 0 : i32
    %c0_i32_2 = arith.constant 0 : i32
    return %c0_i32, %c0_i32_0, %c0_i32_1 : i32, i32, i32
  }
  func.func @transform_2(%arg0: i32, %arg1: i32) -> (i32, i32, i32) {
    %c0_i32 = arith.constant 0 : i32
    %c0_i32_0 = arith.constant 0 : i32
    %c0_i32_1 = arith.constant 0 : i32
    %c0_i32_2 = arith.constant 0 : i32
    return %c0_i32, %c0_i32_0, %c0_i32_1 : i32, i32, i32
  }
  func.func @transform_3(%arg0: i32, %arg1: i32) -> (i32, i32, i32) {
    %c0_i32 = arith.constant 0 : i32
    %c0_i32_0 = arith.constant 0 : i32
    return %arg1, %c0_i32, %arg0 : i32, i32, i32
  }
}

</mosaic_0001>

<llo_original>
// kernel: unet_skip_down_forward.2
$region0: #{unet_skip_down_forward.2}
  #allocation0 [shape = 'u32[]', space=smem, size = 0x4, offset = 0x4, fixed_abs, tag = 'smem constant byte address 0x4 - core index']
  #allocation1 [shape = 'u32[72,128]{1,0:T(1,128)}', space=vmem, size = 0x9000, scoped, tag = 'internal scratch']
  %s0 = inlined_call_operand.vmem [shape: bf16[2,1,8,8,272], index: 0, kind: input, shape index: {}]
  %s1 = inlined_call_operand.vmem [shape: bf16[16,8,8], index: 1, kind: input, shape index: {}]
  %s2 = inlined_call_operand.vmem [shape: bf16[2,8,256], index: 2, kind: output, shape index: {0}]
  %s3 = inlined_call_operand.vmem [shape: f32[1,2,8,1], index: 3, kind: output, shape index: {1}]
  %s4 = inlined_call_operand.vmem [shape: f32[1,2,8,1], index: 4, kind: output, shape index: {2}]
  %5 = xla_tuple %s2, %s3, %s4
  %s6 = sld [smem:[#allocation0]]
  $region57: #{unet_skip_down_forward.2} parent=0
    _
  %s8 = ssub.s32 1, %s6
  %s9 = scalar_select 0, %s8, %s6
  loop: start=0, step=1, limit=4
  $region2: #{unet_skip_down_forward.2} parent=0 // loop_pre_header
    _
  $region3: #{unet_skip_down_forward.2} parent=0 // loop_header
    %s11 = sphi 0, %s15
    %p12 = scmp.ge.s32.totalorder %s11, 4
    %s18 = sphi 0, %s30
    %s19 = sphi 0, %s26
    %s20 = sphi 0, %s18
    %s21 = sphi 0, %s19
    %s22 = sphi 0, %s20
    %s23 = sphi 0, %s21
    %s35 = sphi 0, %s37
    %s38 = sphi 0, %s35
    %s39 = sphi 0, %s38
    %s55 = sphi 0, %s39
    %s59 = sphi 0, %s59
    %s61 = sphi 0, %s59
    %s62 = sphi 0, %s61
    %s76 = sphi 0, %s62
    %s84 = sphi 0, %s86
    %s87 = sphi 0, %s84
    %s88 = sphi 0, %s87
    %s104 = sphi 0, %s88
    %s112 = sphi 0, %s114
    %s115 = sphi 0, %s112
    %s116 = sphi 0, %s115
    %s132 = sphi 0, %s116
    %s140 = sphi 0, %s142
    %s143 = sphi 0, %s140
    %s144 = sphi 0, %s143
    %s160 = sphi 0, %s144
  $region4: #{unet_skip_down_forward.2} parent=0 // loop_header_branch
    %14 = sbr.rel (%p12) target = $region8
  $region5: #{unet_skip_down_forward.2} parent=0 // loop_body
    %s16 = ssub.s32 %s11, 1
    %s17 = ssub.s32 %s11, 2
    %s24 = sadd.s32 1, %s19
    %p25 = scmp.ge.s32.totalorder %s24, 2
    %s26 = scalar_select %p25, 0, %s24
    %s27 = sadd.s32 1, %s18
    %s28 = scalar_select %p25, %s27, %s18
    %p29 = scmp.ge.s32.totalorder %s28, 1
    %s30 = scalar_select %p29, 0, %s28
    %s31 = ssub.s32 %s19, %s26
    %s32 = ssub.s32 %s18, %s30
    %s33 = sor.u32 %s31, %s32
    %p34 = scmp.eq.s32.totalorder %s33, 0
    %s36 = sadd.s32 %s35, 1
    %s37 = scalar_select %p34, %s35, %s36
    %p40 = pneg %p34
    %p41 = scmp.eq.s32.totalorder %s11, 1
    %p42 = por %p40, %p41
    %p43 = scmp.ne.s32.totalorder %s35, %s38
    %p44 = scmp.eq.s32.totalorder %s11, 0
    %p45 = por %p43, %p44
    %p46 = scmp.ne.s32.totalorder %s35, %s38
    %p47 = scmp.eq.s32.totalorder %s16, 1
    %p48 = por %p46, %p47
    %p49 = scmp.ne.s32.totalorder %s38, %s39
    %p50 = scmp.eq.s32.totalorder %s16, 0
    %p51 = por %p49, %p50
    %p52 = scmp.ne.s32.totalorder %s38, %s39
    %p53 = scmp.eq.s32.totalorder %s17, 1
    %p54 = por %p52, %p53
    %p56 = scmp.ne.s32.totalorder %s39, %s55
    %p57 = scmp.eq.s32.totalorder %s17, 0
    %p58 = por %p56, %p57
    %s60 = sadd.s32 %s59, 1
    %p63 = scmp.eq.s32.totalorder %s11, 1
    %p64 = scmp.ne.s32.totalorder %s59, %s61
    %p65 = scmp.eq.s32.totalorder %s11, 0
    %p66 = por %p64, %p65
    %p67 = scmp.ne.s32.totalorder %s59, %s61
    %p68 = scmp.eq.s32.totalorder %s16, 1
    %p69 = por %p67, %p68
    %p70 = scmp.ne.s32.totalorder %s61, %s62
    %p71 = scmp.eq.s32.totalorder %s16, 0
    %p72 = por %p70, %p71
    %p73 = scmp.ne.s32.totalorder %s61, %s62
    %p74 = scmp.eq.s32.totalorder %s17, 1
    %p75 = por %p73, %p74
    %p77 = scmp.ne.s32.totalorder %s62, %s76
    %p78 = scmp.eq.s32.totalorder %s17, 0
    %p79 = por %p77, %p78
    %s80 = ssub.s32 %s19, %s26
    %s81 = ssub.s32 %s18, %s30
    %s82 = sor.u32 %s80, %s81
    %p83 = scmp.eq.s32.totalorder %s82, 0
    %s85 = sadd.s32 %s84, 1
    %s86 = scalar_select %p83, %s84, %s85
    %p89 = pneg %p83
    %p90 = scmp.eq.s32.totalorder %s11, 1
    %p91 = por %p89, %p90
    %p92 = scmp.ne.s32.totalorder %s84, %s87
    %p93 = scmp.eq.s32.totalorder %s11, 0
    %p94 = por %p92, %p93
    %p95 = scmp.ne.s32.totalorder %s84, %s87
    %p96 = scmp.eq.s32.totalorder %s16, 1
    %p97 = por %p95, %p96
    %p98 = scmp.ne.s32.totalorder %s87, %s88
    %p99 = scmp.eq.s32.totalorder %s16, 0
    %p100 = por %p98, %p99
    %p101 = scmp.ne.s32.totalorder %s87, %s88
    %p102 = scmp.eq.s32.totalorder %s17, 1
    %p103 = por %p101, %p102
    %p105 = scmp.ne.s32.totalorder %s88, %s104
    %p106 = scmp.eq.s32.totalorder %s17, 0
    %p107 = por %p105, %p106
    %s108 = ssub.s32 %s18, %s30
    %s109 = ssub.s32 %s19, %s26
    %s110 = sor.u32 %s108, %s109
    %p111 = scmp.eq.s32.totalorder %s110, 0
    %s113 = sadd.s32 %s112, 1
    %s114 = scalar_select %p111, %s112, %s113
    %p117 = pneg %p111
    %p118 = scmp.eq.s32.totalorder %s11, 1
    %p119 = por %p117, %p118
    %p120 = scmp.ne.s32.totalorder %s112, %s115
    %p121 = scmp.eq.s32.totalorder %s11, 0
    %p122 = por %p120, %p121
    %p123 = scmp.ne.s32.totalorder %s112, %s115
    %p124 = scmp.eq.s32.totalorder %s16, 1
    %p125 = por %p123, %p124
    %p126 = scmp.ne.s32.totalorder %s115, %s116
    %p127 = scmp.eq.s32.totalorder %s16, 0
    %p128 = por %p126, %p127
    %p129 = scmp.ne.s32.totalorder %s115, %s116
    %p130 = scmp.eq.s32.totalorder %s17, 1
    %p131 = por %p129, %p130
    %p133 = scmp.ne.s32.totalorder %s116, %s132
    %p134 = scmp.eq.s32.totalorder %s17, 0
    %p135 = por %p133, %p134
    %s136 = ssub.s32 %s18, %s30
    %s137 = ssub.s32 %s19, %s26
    %s138 = sor.u32 %s136, %s137
    %p139 = scmp.eq.s32.totalorder %s138, 0
    %s141 = sadd.s32 %s140, 1
    %s142 = scalar_select %p139, %s140, %s141
    %p145 = pneg %p139
    %p146 = scmp.eq.s32.totalorder %s11, 1
    %p147 = por %p145, %p146
    %p148 = scmp.ne.s32.totalorder %s140, %s143
    %p149 = scmp.eq.s32.totalorder %s11, 0
    %p150 = por %p148, %p149
    %p151 = scmp.ne.s32.totalorder %s140, %s143
    %p152 = scmp.eq.s32.totalorder %s16, 1
    %p153 = por %p151, %p152
    %p154 = scmp.ne.s32.totalorder %s143, %s144
    %p155 = scmp.eq.s32.totalorder %s16, 0
    %p156 = por %p154, %p155
    %p157 = scmp.ne.s32.totalorder %s143, %s144
    %p158 = scmp.eq.s32.totalorder %s17, 1
    %p159 = por %p157, %p158
    %p161 = scmp.ne.s32.totalorder %s144, %s160
    %p162 = scmp.eq.s32.totalorder %s17, 0
    %p163 = por %p161, %p162
    %p164 = scmp.le.s32.totalorder 1, %s11
    %p165 = scmp.lt.s32.totalorder %s11, 3
    %p166 = pnand %p164, %p165
    %p167 = pneg %p166
    // Predicated region
    $region9: #{unet_skip_down_forward.2} parent=5 // pred_check
      _
    $region10: #{unet_skip_down_forward.2} parent=5 // pred_check_branch
      %169 = sbr.rel (%p166) target = $region12
    $region11: #{unet_skip_down_forward.2} parent=5 // pred_region
      %s170 = ssub.s32 %s11, 1
      // Predicated region
      $region13: #{unet_skip_down_forward.2} parent=11 // pred_check
        %p171 = pneg %p72
      $region14: #{unet_skip_down_forward.2} parent=11 // pred_check_branch
        %173 = sbr.rel (%p171) target = $region16
      $region15: #{unet_skip_down_forward.2} parent=11 // pred_region
        _
      $region16: #{unet_skip_down_forward.2} parent=11 // pred_fallthru
        _
    $region12: #{unet_skip_down_forward.2} parent=5 // pred_fallthru
      _
    %p174 = scmp.lt.s32.totalorder %s11, 2
    // Predicated region
    $region17: #{unet_skip_down_forward.2} parent=5 // pred_check
      %p175 = pneg %p174
    $region18: #{unet_skip_down_forward.2} parent=5 // pred_check_branch
      %177 = sbr.rel (%p175) target = $region20
    $region19: #{unet_skip_down_forward.2} parent=5 // pred_region
      // Predicated region
      $region21: #{unet_skip_down_forward.2} parent=19 // pred_check
        %p178 = pneg %p45
      $region22: #{unet_skip_down_forward.2} parent=19 // pred_check_branch
        %180 = sbr.rel (%p178) target = $region24
      $region23: #{unet_skip_down_forward.2} parent=19 // pred_region
        %p181 = scmp.lt.s32.totalorder %s19, 1
        %s182 = scalar_select %p181, %s19, 1
        %p183 = scmp.lt.s32.totalorder %s18, 0
        %s184 = scalar_select %p183, %s18, 0
        %s185 = smul.addr %s184, 24
        %s186 = smul.addr %s182, 24
        %s187 = sadd.s32 %s185, %s186
        %s188 = smul.addr %s187, 4
        %s189 = scalar_lea.vmem %s0, %s188
      $region24: #{unet_skip_down_forward.2} parent=19 // pred_fallthru
        _
    $region20: #{unet_skip_down_forward.2} parent=5 // pred_fallthru
      _
    %p190 = scmp.le.s32.totalorder 1, %s11
    %p191 = scmp.lt.s32.totalorder %s11, 3
    %p192 = pnand %p190, %p191
    %p193 = pneg %p192
    // Predicated region
    $region25: #{unet_skip_down_forward.2} parent=5 // pred_check
      _
    $region26: #{unet_skip_down_forward.2} parent=5 // pred_check_branch
      %195 = sbr.rel (%p192) target = $region28
    $region27: #{unet_skip_down_forward.2} parent=5 // pred_region
      %s196 = ssub.s32 %s11, 1
      %p197 = scmp.lt.s32.totalorder %s21, 1
      %s198 = scalar_select %p197, %s21, 1
      %p199 = scmp.lt.s32.totalorder %s20, 0
      %s200 = scalar_select %p199, %s20, 0
      %s201 = smul.addr %s200, 24
      %s202 = smul.addr %s198, 24
      %s203 = sadd.s32 %s201, %s202
      %s204 = smul.addr %s203, 4
      %s205 = scalar_lea.vmem %s0, %s204
      %p206 = pneg %p51
      %p207 = pneg %p48
      %p208 = pneg %p72
      %p209 = pneg %p69
      %p210 = pneg %p100
      %p211 = pneg %p97
      %s212 = smul.u32 2, %s20
      %p213 = scmp.lt.s32.totalorder %s21, 1
      %s214 = scalar_select %p213, %s21, 1
      %p215 = scmp.lt.s32.totalorder %s212, 1
      %s216 = scalar_select %p215, %s212, 1
      %s217 = smul.addr %s214, 2
      %s218 = sadd.s32 %s216, %s217
      %s219 = smul.addr %s218, 4
      %s220 = scalar_lea.vmem %s2, %s219
      %p221 = pneg %p128
      %p222 = pneg %p125
      %p223 = scmp.lt.s32.totalorder %s20, 0
      %s224 = scalar_select %p223, %s20, 0
      %p225 = scmp.lt.s32.totalorder %s21, 1
      %s226 = scalar_select %p225, %s21, 1
      %s227 = smul.addr %s224, 2
      %s228 = sadd.s32 %s226, %s227
      %s229 = smul.addr %s228, 8
      %s230 = scalar_lea.vmem %s3, %s229
      %p231 = pneg %p156
      %p232 = pneg %p153
      %p233 = scmp.lt.s32.totalorder %s20, 0
      %s234 = scalar_select %p233, %s20, 0
      %p235 = scmp.lt.s32.totalorder %s21, 1
      %s236 = scalar_select %p235, %s21, 1
      %s237 = smul.addr %s234, 2
      %s238 = sadd.s32 %s236, %s237
      %s239 = smul.addr %s238, 8
      %s240 = scalar_lea.vmem %s4, %s239
      %p241 = scmp.lt.s32.totalorder %s21, 1
      %s242 = scalar_select %p241, %s21, 1
      %p243 = scmp.lt.s32.totalorder %s20, 0
      %s244 = scalar_select %p243, %s20, 0
      %s245 = smul.addr %s244, 24
      %s246 = smul.addr %s242, 24
      %s247 = sadd.s32 %s245, %s246
      %s248 = smul.addr %s247, 4
      %s249 = scalar_lea.vmem %s0, %s248
      %s250 = smul.u32 2, %s20
      %p251 = scmp.lt.s32.totalorder %s21, 1
      %s252 = scalar_select %p251, %s21, 1
      %p253 = scmp.lt.s32.totalorder %s250, 1
      %s254 = scalar_select %p253, %s250, 1
      %s255 = smul.addr %s252, 2
      %s256 = sadd.s32 %s254, %s255
      %s257 = smul.addr %s256, 4
      %s258 = scalar_lea.vmem %s2, %s257
      %s259 = smul.u32 2, %s20
      %p260 = scmp.lt.s32.totalorder %s20, 0
      %s261 = scalar_select %p260, %s20, 0
      %p262 = scmp.lt.s32.totalorder %s21, 1
      %s263 = scalar_select %p262, %s21, 1
      %s264 = smul.addr %s261, 2
      %s265 = sadd.s32 %s263, %s264
      %s266 = smul.addr %s265, 8
      %s267 = scalar_lea.vmem %s3, %s266
      %p268 = scmp.lt.s32.totalorder %s20, 0
      %s269 = scalar_select %p268, %s20, 0
      %p270 = scmp.lt.s32.totalorder %s21, 1
      %s271 = scalar_select %p270, %s21, 1
      %s272 = smul.addr %s269, 2
      %s273 = sadd.s32 %s271, %s272
      %s274 = smul.addr %s273, 8
      %s275 = scalar_lea.vmem %s4, %s274
      %v277 = vld [vmem:[%s249] sm:$0xff]
      %v278 = vld [vmem:[%s249 + $0x8] sm:$0xf]
      %v279 = vld [vmem:[%s249 + $0xc] sm:$0xff]
      %v280 = vld [vmem:[%s249 + $0x14] sm:$0xf]
      %v281 = vld [vmem:[%s249 + $0x18] sm:$0xff]
      %v282 = vld [vmem:[%s249 + $0x20] sm:$0xf]
      %v283 = vld [vmem:[%s249 + $0x24] sm:$0xff]
      %v284 = vld [vmem:[%s249 + $0x2c] sm:$0xf]
      %v285 = vld [vmem:[%s249 + $0x30] sm:$0xff]
      %v286 = vld [vmem:[%s249 + $0x38] sm:$0xf]
      %v287 = vld [vmem:[%s249 + $0x3c] sm:$0xff]
      %v288 = vld [vmem:[%s249 + $0x44] sm:$0xf]
      %v289 = vld [vmem:[%s249 + $0x48] sm:$0xff]
      %v290 = vld [vmem:[%s249 + $0x50] sm:$0xf]
      %v291 = vld [vmem:[%s249 + $0x54] sm:$0xff]
      %v292 = vld [vmem:[%s249 + $0x5c] sm:$0xf]
      %v293 = vunpack.c.l.bf16 %v277
      %v294 = vunpack.c.h.bf16 %v277
      %v295 = vunpack.c.l.bf16 %v278
      %v296 = vunpack.c.l.bf16 %v279
      %v297 = vunpack.c.h.bf16 %v279
      %v298 = vunpack.c.l.bf16 %v280
      %v299 = vunpack.c.l.bf16 %v281
      %v300 = vunpack.c.h.bf16 %v281
      %v301 = vunpack.c.l.bf16 %v282
      %v302 = vunpack.c.l.bf16 %v283
      %v303 = vunpack.c.h.bf16 %v283
      %v304 = vunpack.c.l.bf16 %v284
      %v305 = vunpack.c.l.bf16 %v285
      %v306 = vunpack.c.h.bf16 %v285
      %v307 = vunpack.c.l.bf16 %v286
      %v308 = vunpack.c.l.bf16 %v287
      %v309 = vunpack.c.h.bf16 %v287
      %v310 = vunpack.c.l.bf16 %v288
      %v311 = vunpack.c.l.bf16 %v289
      %v312 = vunpack.c.h.bf16 %v289
      %v313 = vunpack.c.l.bf16 %v290
      %v314 = vunpack.c.l.bf16 %v291
      %v315 = vunpack.c.h.bf16 %v291
      %v316 = vunpack.c.l.bf16 %v292
      %vm317 = vcmp.gt.f32.partialorder %v293, 0.0
      %vm318 = vcmp.gt.f32.partialorder %v294, 0.0
      %vm319 = vcmp.gt.f32.partialorder %v295, 0.0
      %vm320 = vcmp.gt.f32.partialorder %v296, 0.0
      %vm321 = vcmp.gt.f32.partialorder %v297, 0.0
      %vm322 = vcmp.gt.f32.partialorder %v298, 0.0
      %vm323 = vcmp.gt.f32.partialorder %v299, 0.0
      %vm324 = vcmp.gt.f32.partialorder %v300, 0.0
      %vm325 = vcmp.gt.f32.partialorder %v301, 0.0
      %vm326 = vcmp.gt.f32.partialorder %v302, 0.0
      %vm327 = vcmp.gt.f32.partialorder %v303, 0.0
      %vm328 = vcmp.gt.f32.partialorder %v304, 0.0
      %vm329 = vcmp.gt.f32.partialorder %v305, 0.0
      %vm330 = vcmp.gt.f32.partialorder %v306, 0.0
      %vm331 = vcmp.gt.f32.partialorder %v307, 0.0
      %vm332 = vcmp.gt.f32.partialorder %v308, 0.0
      %vm333 = vcmp.gt.f32.partialorder %v309, 0.0
      %vm334 = vcmp.gt.f32.partialorder %v310, 0.0
      %vm335 = vcmp.gt.f32.partialorder %v311, 0.0
      %vm336 = vcmp.gt.f32.partialorder %v312, 0.0
      %vm337 = vcmp.gt.f32.partialorder %v313, 0.0
      %vm338 = vcmp.gt.f32.partialorder %v314, 0.0
      %vm339 = vcmp.gt.f32.partialorder %v315, 0.0
      %vm340 = vcmp.gt.f32.partialorder %v316, 0.0
      %v341 = vmul.f32 %v293, 0.20019531
      %v342 = vmul.f32 %v294, 0.20019531
      %v343 = vmul.f32 %v295, 0.20019531
      %v344 = vmul.f32 %v296, 0.20019531
      %v345 = vmul.f32 %v297, 0.20019531
      %v346 = vmul.f32 %v298, 0.20019531
      %v347 = vmul.f32 %v299, 0.20019531
      %v348 = vmul.f32 %v300, 0.20019531
      %v349 = vmul.f32 %v301, 0.20019531
      %v350 = vmul.f32 %v302, 0.20019531
      %v351 = vmul.f32 %v303, 0.20019531
      %v352 = vmul.f32 %v304, 0.20019531
      %v353 = vmul.f32 %v305, 0.20019531
      %v354 = vmul.f32 %v306, 0.20019531
      %v355 = vmul.f32 %v307, 0.20019531
      %v356 = vmul.f32 %v308, 0.20019531
      %v357 = vmul.f32 %v309, 0.20019531
      %v358 = vmul.f32 %v310, 0.20019531
      %v359 = vmul.f32 %v311, 0.20019531
      %v360 = vmul.f32 %v312, 0.20019531
      %v361 = vmul.f32 %v313, 0.20019531
      %v362 = vmul.f32 %v314, 0.20019531
      %v363 = vmul.f32 %v315, 0.20019531
      %v364 = vmul.f32 %v316, 0.20019531
      %v365 = vpack.c.bf16 %v342, %v341
      %v366 = vpack.c.bf16 %v343, %v343
      %v367 = vpack.c.bf16 %v345, %v344
      %v368 = vpack.c.bf16 %v346, %v346
      %v369 = vpack.c.bf16 %v348, %v347
      %v370 = vpack.c.bf16 %v349, %v349
      %v371 = vpack.c.bf16 %v351, %v350
      %v372 = vpack.c.bf16 %v352, %v352
      %v373 = vpack.c.bf16 %v354, %v353
      %v374 = vpack.c.bf16 %v355, %v355
      %v375 = vpack.c.bf16 %v357, %v356
      %v376 = vpack.c.bf16 %v358, %v358
      %v377 = vpack.c.bf16 %v360, %v359
      %v378 = vpack.c.bf16 %v361, %v361
      %v379 = vpack.c.bf16 %v363, %v362
      %v380 = vpack.c.bf16 %v364, %v364
      %vm381 = vmpackc.low %vm318, %vm317
      %vm382 = vmpackc.low %vm319, %vm319
      %vm383 = vmpackc.low %vm321, %vm320
      %vm384 = vmpackc.low %vm322, %vm322
      %vm385 = vmpackc.low %vm324, %vm323
      %vm386 = vmpackc.low %vm325, %vm325
      %vm387 = vmpackc.low %vm327, %vm326
      %vm388 = vmpackc.low %vm328, %vm328
      %vm389 = vmpackc.low %vm330, %vm329
      %vm390 = vmpackc.low %vm331, %vm331
      %vm391 = vmpackc.low %vm333, %vm332
      %vm392 = vmpackc.low %vm334, %vm334
      %vm393 = vmpackc.low %vm336, %vm335
      %vm394 = vmpackc.low %vm337, %vm337
      %vm395 = vmpackc.low %vm339, %vm338
      %vm396 = vmpackc.low %vm340, %vm340
      %v397 = vsel %vm381, %v277, %v365
      %v398 = vsel %vm382, %v278, %v366
      %v399 = vsel %vm383, %v279, %v367
      %v400 = vsel %vm384, %v280, %v368
      %v401 = vsel %vm385, %v281, %v369
      %v402 = vsel %vm386, %v282, %v370
      %v403 = vsel %vm387, %v283, %v371
      %v404 = vsel %vm388, %v284, %v372
      %v405 = vsel %vm389, %v285, %v373
      %v406 = vsel %vm390, %v286, %v374
      %v407 = vsel %vm391, %v287, %v375
      %v408 = vsel %vm392, %v288, %v376
      %v409 = vsel %vm393, %v289, %v377
      %v410 = vsel %vm394, %v290, %v378
      %v411 = vsel %vm395, %v291, %v379
      %v412 = vsel %vm396, %v292, %v380
      %v413 = vld [vmem:[%s1] sm:$0xf]
      %s414 = scalar_lea.vmem %s1, 4
      %v415 = vld [vmem:[%s414] sm:$0xf]
      %v417 = vunpack.c.l.b16 %v399
      %v418 = vunpack.c.h.b16 %v399
      %v419 = vpack.c.b16 %v417, %v417
      %v420 = vpack.c.b16 %v418, %v418
      %vm421 = vcmask 64512
      %v423 = vsel %vm421, %v415, 0
      %vm425 = vcmask 1043456
      %v427 = vsel %vm425, %v419, 0
      %v430 = vsel %vm425, %v420, 0
      %432 = vmatpush.bf16.msra.mxu0 0
      %433 = vmatpush.bf16.msra.mxu0 0
      %434 = vmatpush.bf16.msra.mxu0 0
      %435 = vmatpush.bf16.msra.mxu0 0
      %436 = vmatpush.bf16.msra.mxu0 0
      %437 = vmatpush.bf16.msra.mxu0 0
      %438 = vmatpush.bf16.msra.mxu0 0
      %439 = vmatpush.bf16.msra.mxu0 %v427
      %440 = vmatmul.bf16.gmra.mxu0 %v423
      %v441 = vpop.f32.mrf.mxu0
      %v442 = vadd.f32 0.0, %v441
      %v443 = vpop.f32.mrf.mxu0
      %444 = vdwg.mxu0
      %445 = vmatpush.bf16.msra.mxu0 0
      %446 = vmatpush.bf16.msra.mxu0 0
      %447 = vmatpush.bf16.msra.mxu0 0
      %448 = vmatpush.bf16.msra.mxu0 0
      %449 = vmatpush.bf16.msra.mxu0 0
      %450 = vmatpush.bf16.msra.mxu0 0
      %451 = vmatpush.bf16.msra.mxu0 0
      %452 = vmatpush.bf16.msra.mxu0 %v430
      %453 = vmatmul.bf16.gmra.mxu0 %v423
      %v454 = vpop.f32.mrf.mxu0
      %v455 = vadd.f32 0.0, %v454
      %v456 = vpop.f32.mrf.mxu0
      %457 = vdwg.mxu0
      %v459 = vunpack.c.l.b16 %v397
      %v460 = vunpack.c.h.b16 %v397
      %v461 = vpack.c.b16 %v459, %v459
      %v462 = vpack.c.b16 %v460, %v460
      %v464 = vsel %vm421, %v413, 0
      %v467 = vsel %vm425, %v461, 0
      %v470 = vsel %vm425, %v462, 0
      %472 = vmatpush.bf16.msra.mxu0 0
      %473 = vmatpush.bf16.msra.mxu0 0
      %474 = vmatpush.bf16.msra.mxu0 0
      %475 = vmatpush.bf16.msra.mxu0 0
      %476 = vmatpush.bf16.msra.mxu0 0
      %477 = vmatpush.bf16.msra.mxu0 0
      %478 = vmatpush.bf16.msra.mxu0 0
      %479 = vmatpush.bf16.msra.mxu0 %v467
      %480 = vmatmul.bf16.gmra.mxu0 %v464
      %v481 = vpop.f32.mrf.mxu0
      %v482 = vadd.f32 %v442, %v481
      %v483 = vpop.f32.mrf.mxu0
      %484 = vdwg.mxu0
      %485 = vmatpush.bf16.msra.mxu0 0
      %486 = vmatpush.bf16.msra.mxu0 0
      %487 = vmatpush.bf16.msra.mxu0 0
      %488 = vmatpush.bf16.msra.mxu0 0
      %489 = vmatpush.bf16.msra.mxu0 0
      %490 = vmatpush.bf16.msra.mxu0 0
      %491 = vmatpush.bf16.msra.mxu0 0
      %492 = vmatpush.bf16.msra.mxu0 %v470
      %493 = vmatmul.bf16.gmra.mxu0 %v464
      %v494 = vpop.f32.mrf.mxu0
      %v495 = vadd.f32 %v455, %v494
      %v496 = vpop.f32.mrf.mxu0
      %497 = vdwg.mxu0
      %s498 = scalar_lea.vmem %s1, 8
      %v499 = vld [vmem:[%s498] sm:$0xf]
      %v501 = vunpack.c.l.b16 %v401
      %v502 = vunpack.c.h.b16 %v401
      %v503 = vpack.c.b16 %v501, %v501
      %v504 = vpack.c.b16 %v502, %v502
      %v506 = vsel %vm421, %v499, 0
      %v509 = vsel %vm425, %v503, 0
      %v512 = vsel %vm425, %v504, 0
      %514 = vmatpush.bf16.msra.mxu0 0
      %515 = vmatpush.bf16.msra.mxu0 0
      %516 = vmatpush.bf16.msra.mxu0 0
      %517 = vmatpush.bf16.msra.mxu0 0
      %518 = vmatpush.bf16.msra.mxu0 0
      %519 = vmatpush.bf16.msra.mxu0 0
      %520 = vmatpush.bf16.msra.mxu0 0
      %521 = vmatpush.bf16.msra.mxu0 %v509
      %522 = vmatmul.bf16.gmra.mxu0 %v506
      %v523 = vpop.f32.mrf.mxu0
      %v524 = vadd.f32 0.0, %v523
      %v525 = vpop.f32.mrf.mxu0
      %526 = vdwg.mxu0
      %527 = vmatpush.bf16.msra.mxu0 0
      %528 = vmatpush.bf16.msra.mxu0 0
      %529 = vmatpush.bf16.msra.mxu0 0
      %530 = vmatpush.bf16.msra.mxu0 0
      %531 = vmatpush.bf16.msra.mxu0 0
      %532 = vmatpush.bf16.msra.mxu0 0
      %533 = vmatpush.bf16.msra.mxu0 0
      %534 = vmatpush.bf16.msra.mxu0 %v512
      %535 = vmatmul.bf16.gmra.mxu0 %v506
      %v536 = vpop.f32.mrf.mxu0
      %v537 = vadd.f32 0.0, %v536
      %v538 = vpop.f32.mrf.mxu0
      %539 = vdwg.mxu0
      %v540 = vadd.f32 %v482, %v524
      %v541 = vadd.f32 %v495, %v537
      %s542 = scalar_lea.vmem %s1, 12
      %v543 = vld [vmem:[%s542] sm:$0xf]
      %v545 = vunpack.c.l.b16 %v403
      %v546 = vunpack.c.h.b16 %v403
      %v547 = vpack.c.b16 %v545, %v545
      %v548 = vpack.c.b16 %v546, %v546
      %v550 = vsel %vm421, %v543, 0
      %v553 = vsel %vm425, %v547, 0
      %v556 = vsel %vm425, %v548, 0
      %558 = vmatpush.bf16.msra.mxu0 0
      %559 = vmatpush.bf16.msra.mxu0 0
      %560 = vmatpush.bf16.msra.mxu0 0
      %561 = vmatpush.bf16.msra.mxu0 0
      %562 = vmatpush.bf16.msra.mxu0 0
      %563 = vmatpush.bf16.msra.mxu0 0
      %564 = vmatpush.bf16.msra.mxu0 0
      %565 = vmatpush.bf16.msra.mxu0 %v553
      %566 = vmatmul.bf16.gmra.mxu0 %v550
      %v567 = vpop.f32.mrf.mxu0
      %v568 = vadd.f32 0.0, %v567
      %v569 = vpop.f32.mrf.mxu0
      %570 = vdwg.mxu0
      %571 = vmatpush.bf16.msra.mxu0 0
      %572 = vmatpush.bf16.msra.mxu0 0
      %573 = vmatpush.bf16.msra.mxu0 0
      %574 = vmatpush.bf16.msra.mxu0 0
      %575 = vmatpush.bf16.msra.mxu0 0
      %576 = vmatpush.bf16.msra.mxu0 0
      %577 = vmatpush.bf16.msra.mxu0 0
      %578 = vmatpush.bf16.msra.mxu0 %v556
      %579 = vmatmul.bf16.gmra.mxu0 %v550
      %v580 = vpop.f32.mrf.mxu0
      %v581 = vadd.f32 0.0, %v580
      %v582 = vpop.f32.mrf.mxu0
      %583 = vdwg.mxu0
      %v584 = vadd.f32 %v540, %v568
      %v585 = vadd.f32 %v541, %v581
      %s586 = scalar_lea.vmem %s1, 16
      %v587 = vld [vmem:[%s586] sm:$0xf]
      %v589 = vunpack.c.l.b16 %v405
      %v590 = vunpack.c.h.b16 %v405
      %v591 = vpack.c.b16 %v589, %v589
      %v592 = vpack.c.b16 %v590, %v590
      %v594 = vsel %vm421, %v587, 0
      %v597 = vsel %vm425, %v591, 0
      %v600 = vsel %vm425, %v592, 0
      %602 = vmatpush.bf16.msra.mxu0 0
      %603 = vmatpush.bf16.msra.mxu0 0
      %604 = vmatpush.bf16.msra.mxu0 0
      %605 = vmatpush.bf16.msra.mxu0 0
      %606 = vmatpush.bf16.msra.mxu0 0
      %607 = vmatpush.bf16.msra.mxu0 0
      %608 = vmatpush.bf16.msra.mxu0 0
      %609 = vmatpush.bf16.msra.mxu0 %v597
      %610 = vmatmul.bf16.gmra.mxu0 %v594
      %v611 = vpop.f32.mrf.mxu0
      %v612 = vadd.f32 0.0, %v611
      %v613 = vpop.f32.mrf.mxu0
      %614 = vdwg.mxu0
      %615 = vmatpush.bf16.msra.mxu0 0
      %616 = vmatpush.bf16.msra.mxu0 0
      %617 = vmatpush.bf16.msra.mxu0 0
      %618 = vmatpush.bf16.msra.mxu0 0
      %619 = vmatpush.bf16.msra.mxu0 0
      %620 = vmatpush.bf16.msra.mxu0 0
      %621 = vmatpush.bf16.msra.mxu0 0
      %622 = vmatpush.bf16.msra.mxu0 %v600
      %623 = vmatmul.bf16.gmra.mxu0 %v594
      %v624 = vpop.f32.mrf.mxu0
      %v625 = vadd.f32 0.0, %v624
      %v626 = vpop.f32.mrf.mxu0
      %627 = vdwg.mxu0
      %v628 = vadd.f32 %v584, %v612
      %v629 = vadd.f32 %v585, %v625
      %s630 = scalar_lea.vmem %s1, 20
      %v631 = vld [vmem:[%s630] sm:$0xf]
      %v633 = vunpack.c.l.b16 %v407
      %v634 = vunpack.c.h.b16 %v407
      %v635 = vpack.c.b16 %v633, %v633
      %v636 = vpack.c.b16 %v634, %v634
      %v638 = vsel %vm421, %v631, 0
      %v641 = vsel %vm425, %v635, 0
      %v644 = vsel %vm425, %v636, 0
      %646 = vmatpush.bf16.msra.mxu0 0
      %647 = vmatpush.bf16.msra.mxu0 0
      %648 = vmatpush.bf16.msra.mxu0 0
      %649 = vmatpush.bf16.msra.mxu0 0
      %650 = vmatpush.bf16.msra.mxu0 0
      %651 = vmatpush.bf16.msra.mxu0 0
      %652 = vmatpush.bf16.msra.mxu0 0
      %653 = vmatpush.bf16.msra.mxu0 %v641
      %654 = vmatmul.bf16.gmra.mxu0 %v638
      %v655 = vpop.f32.mrf.mxu0
      %v656 = vadd.f32 0.0, %v655
      %v657 = vpop.f32.mrf.mxu0
      %658 = vdwg.mxu0
      %659 = vmatpush.bf16.msra.mxu0 0
      %660 = vmatpush.bf16.msra.mxu0 0
      %661 = vmatpush.bf16.msra.mxu0 0
      %662 = vmatpush.bf16.msra.mxu0 0
      %663 = vmatpush.bf16.msra.mxu0 0
      %664 = vmatpush.bf16.msra.mxu0 0
      %665 = vmatpush.bf16.msra.mxu0 0
      %666 = vmatpush.bf16.msra.mxu0 %v644
      %667 = vmatmul.bf16.gmra.mxu0 %v638
      %v668 = vpop.f32.mrf.mxu0
      %v669 = vadd.f32 0.0, %v668
      %v670 = vpop.f32.mrf.mxu0
      %671 = vdwg.mxu0
      %v672 = vadd.f32 %v628, %v656
      %v673 = vadd.f32 %v629, %v669
      %s674 = scalar_lea.vmem %s1, 24
      %v675 = vld [vmem:[%s674] sm:$0xf]
      %v677 = vunpack.c.l.b16 %v409
      %v678 = vunpack.c.h.b16 %v409
      %v679 = vpack.c.b16 %v677, %v677
      %v680 = vpack.c.b16 %v678, %v678
      %v682 = vsel %vm421, %v675, 0
      %v685 = vsel %vm425, %v679, 0
      %v688 = vsel %vm425, %v680, 0
      %690 = vmatpush.bf16.msra.mxu0 0
      %691 = vmatpush.bf16.msra.mxu0 0
      %692 = vmatpush.bf16.msra.mxu0 0
      %693 = vmatpush.bf16.msra.mxu0 0
      %694 = vmatpush.bf16.msra.mxu0 0
      %695 = vmatpush.bf16.msra.mxu0 0
      %696 = vmatpush.bf16.msra.mxu0 0
      %697 = vmatpush.bf16.msra.mxu0 %v685
      %698 = vmatmul.bf16.gmra.mxu0 %v682
      %v699 = vpop.f32.mrf.mxu0
      %v700 = vadd.f32 0.0, %v699
      %v701 = vpop.f32.mrf.mxu0
      %702 = vdwg.mxu0
      %703 = vmatpush.bf16.msra.mxu0 0
      %704 = vmatpush.bf16.msra.mxu0 0
      %705 = vmatpush.bf16.msra.mxu0 0
      %706 = vmatpush.bf16.msra.mxu0 0
      %707 = vmatpush.bf16.msra.mxu0 0
      %708 = vmatpush.bf16.msra.mxu0 0
      %709 = vmatpush.bf16.msra.mxu0 0
      %710 = vmatpush.bf16.msra.mxu0 %v688
      %711 = vmatmul.bf16.gmra.mxu0 %v682
      %v712 = vpop.f32.mrf.mxu0
      %v713 = vadd.f32 0.0, %v712
      %v714 = vpop.f32.mrf.mxu0
      %715 = vdwg.mxu0
      %v716 = vadd.f32 %v672, %v700
      %v717 = vadd.f32 %v673, %v713
      %s718 = scalar_lea.vmem %s1, 28
      %v719 = vld [vmem:[%s718] sm:$0xf]
      %v721 = vunpack.c.l.b16 %v411
      %v722 = vunpack.c.h.b16 %v411
      %v723 = vpack.c.b16 %v721, %v721
      %v724 = vpack.c.b16 %v722, %v722
      %v726 = vsel %vm421, %v719, 0
      %v729 = vsel %vm425, %v723, 0
      %v732 = vsel %vm425, %v724, 0
      %734 = vmatpush.bf16.msra.mxu0 0
      %735 = vmatpush.bf16.msra.mxu0 0
      %736 = vmatpush.bf16.msra.mxu0 0
      %737 = vmatpush.bf16.msra.mxu0 0
      %738 = vmatpush.bf16.msra.mxu0 0
      %739 = vmatpush.bf16.msra.mxu0 0
      %740 = vmatpush.bf16.msra.mxu0 0
      %741 = vmatpush.bf16.msra.mxu0 %v729
      %742 = vmatmul.bf16.gmra.mxu0 %v726
      %v743 = vpop.f32.mrf.mxu0
      %v744 = vadd.f32 0.0, %v743
      %v745 = vpop.f32.mrf.mxu0
      %746 = vdwg.mxu0
      %747 = vmatpush.bf16.msra.mxu0 0
      %748 = vmatpush.bf16.msra.mxu0 0
      %749 = vmatpush.bf16.msra.mxu0 0
      %750 = vmatpush.bf16.msra.mxu0 0
      %751 = vmatpush.bf16.msra.mxu0 0
      %752 = vmatpush.bf16.msra.mxu0 0
      %753 = vmatpush.bf16.msra.mxu0 0
      %754 = vmatpush.bf16.msra.mxu0 %v732
      %755 = vmatmul.bf16.gmra.mxu0 %v726
      %v756 = vpop.f32.mrf.mxu0
      %v757 = vadd.f32 0.0, %v756
      %v758 = vpop.f32.mrf.mxu0
      %759 = vdwg.mxu0
      %v760 = vadd.f32 %v716, %v744
      %v761 = vadd.f32 %v717, %v757
      %s762 = scalar_lea.vmem %s1, 32
      %v763 = vld [vmem:[%s762] sm:$0xf]
      %v765 = vunpack.c.l.b16 %v398
      %v766 = vpack.c.b16 %v765, %v765
      %767 = vrot.lane.b32.xlu0 %v461, 112
      %v768 = vpop.permute.xlu0 %767
      %769 = vrot.lane.b32.xlu0 %v462, 112
      %v770 = vpop.permute.xlu0 %769
      %771 = vrot.lane.b32.xlu0 %v766, 112
      %v772 = vpop.permute.xlu0 %771
      %vm773 = vcmask 916480
      %v774 = vsel %vm773, %v768, %v770
      %v775 = vsel %vm773, %v770, %v772
      %v777 = vsel %vm421, %v763, 0
      %v780 = vsel %vm425, %v774, 0
      %v783 = vsel %vm425, %v775, 0
      %785 = vmatpush.bf16.msra.mxu0 0
      %786 = vmatpush.bf16.msra.mxu0 0
      %787 = vmatpush.bf16.msra.mxu0 0
      %788 = vmatpush.bf16.msra.mxu0 0
      %789 = vmatpush.bf16.msra.mxu0 0
      %790 = vmatpush.bf16.msra.mxu0 0
      %791 = vmatpush.bf16.msra.mxu0 0
      %792 = vmatpush.bf16.msra.mxu0 %v780
      %793 = vmatmul.bf16.gmra.mxu0 %v777
      %v794 = vpop.f32.mrf.mxu0
      %v795 = vadd.f32 0.0, %v794
      %v796 = vpop.f32.mrf.mxu0
      %797 = vdwg.mxu0
      %798 = vmatpush.bf16.msra.mxu0 0
      %799 = vmatpush.bf16.msra.mxu0 0
      %800 = vmatpush.bf16.msra.mxu0 0
      %801 = vmatpush.bf16.msra.mxu0 0
      %802 = vmatpush.bf16.msra.mxu0 0
      %803 = vmatpush.bf16.msra.mxu0 0
      %804 = vmatpush.bf16.msra.mxu0 0
      %805 = vmatpush.bf16.msra.mxu0 %v783
      %806 = vmatmul.bf16.gmra.mxu0 %v777
      %v807 = vpop.f32.mrf.mxu0
      %v808 = vadd.f32 0.0, %v807
      %v809 = vpop.f32.mrf.mxu0
      %810 = vdwg.mxu0
      %v811 = vadd.f32 %v760, %v795
      %v812 = vadd.f32 %v761, %v808
      %s813 = scalar_lea.vmem %s1, 36
      %v814 = vld [vmem:[%s813] sm:$0xf]
      %v816 = vunpack.c.l.b16 %v400
      %v817 = vpack.c.b16 %v816, %v816
      %818 = vrot.lane.b32.xlu0 %v419, 112
      %v819 = vpop.permute.xlu0 %818
      %820 = vrot.lane.b32.xlu0 %v420, 112
      %v821 = vpop.permute.xlu0 %820
      %822 = vrot.lane.b32.xlu0 %v817, 112
      %v823 = vpop.permute.xlu0 %822
      %v824 = vsel %vm773, %v819, %v821
      %v825 = vsel %vm773, %v821, %v823
      %v827 = vsel %vm421, %v814, 0
      %v830 = vsel %vm425, %v824, 0
      %v833 = vsel %vm425, %v825, 0
      %835 = vmatpush.bf16.msra.mxu0 0
      %836 = vmatpush.bf16.msra.mxu0 0
      %837 = vmatpush.bf16.msra.mxu0 0
      %838 = vmatpush.bf16.msra.mxu0 0
      %839 = vmatpush.bf16.msra.mxu0 0
      %840 = vmatpush.bf16.msra.mxu0 0
      %841 = vmatpush.bf16.msra.mxu0 0
      %842 = vmatpush.bf16.msra.mxu0 %v830
      %843 = vmatmul.bf16.gmra.mxu0 %v827
      %v844 = vpop.f32.mrf.mxu0
      %v845 = vadd.f32 0.0, %v844
      %v846 = vpop.f32.mrf.mxu0
      %847 = vdwg.mxu0
      %848 = vmatpush.bf16.msra.mxu0 0
      %849 = vmatpush.bf16.msra.mxu0 0
      %850 = vmatpush.bf16.msra.mxu0 0
      %851 = vmatpush.bf16.msra.mxu0 0
      %852 = vmatpush.bf16.msra.mxu0 0
      %853 = vmatpush.bf16.msra.mxu0 0
      %854 = vmatpush.bf16.msra.mxu0 0
      %855 = vmatpush.bf16.msra.mxu0 %v833
      %856 = vmatmul.bf16.gmra.mxu0 %v827
      %v857 = vpop.f32.mrf.mxu0
      %v858 = vadd.f32 0.0, %v857
      %v859 = vpop.f32.mrf.mxu0
      %860 = vdwg.mxu0
      %v861 = vadd.f32 %v811, %v845
      %v862 = vadd.f32 %v812, %v858
      %s863 = scalar_lea.vmem %s1, 40
      %v864 = vld [vmem:[%s863] sm:$0xf]
      %v866 = vunpack.c.l.b16 %v402
      %v867 = vpack.c.b16 %v866, %v866
      %868 = vrot.lane.b32.xlu0 %v503, 112
      %v869 = vpop.permute.xlu0 %868
      %870 = vrot.lane.b32.xlu0 %v504, 112
      %v871 = vpop.permute.xlu0 %870
      %872 = vrot.lane.b32.xlu0 %v867, 112
      %v873 = vpop.permute.xlu0 %872
      %v874 = vsel %vm773, %v869, %v871
      %v875 = vsel %vm773, %v871, %v873
      %v877 = vsel %vm421, %v864, 0
      %v880 = vsel %vm425, %v874, 0
      %v883 = vsel %vm425, %v875, 0
      %885 = vmatpush.bf16.msra.mxu0 0
      %886 = vmatpush.bf16.msra.mxu0 0
      %887 = vmatpush.bf16.msra.mxu0 0
      %888 = vmatpush.bf16.msra.mxu0 0
      %889 = vmatpush.bf16.msra.mxu0 0
      %890 = vmatpush.bf16.msra.mxu0 0
      %891 = vmatpush.bf16.msra.mxu0 0
      %892 = vmatpush.bf16.msra.mxu0 %v880
      %893 = vmatmul.bf16.gmra.mxu0 %v877
      %v894 = vpop.f32.mrf.mxu0
      %v895 = vadd.f32 0.0, %v894
      %v896 = vpop.f32.mrf.mxu0
      %897 = vdwg.mxu0
      %898 = vmatpush.bf16.msra.mxu0 0
      %899 = vmatpush.bf16.msra.mxu0 0
      %900 = vmatpush.bf16.msra.mxu0 0
      %901 = vmatpush.bf16.msra.mxu0 0
      %902 = vmatpush.bf16.msra.mxu0 0
      %903 = vmatpush.bf16.msra.mxu0 0
      %904 = vmatpush.bf16.msra.mxu0 0
      %905 = vmatpush.bf16.msra.mxu0 %v883
      %906 = vmatmul.bf16.gmra.mxu0 %v877
      %v907 = vpop.f32.mrf.mxu0
      %v908 = vadd.f32 0.0, %v907
      %v909 = vpop.f32.mrf.mxu0
      %910 = vdwg.mxu0
      %v911 = vadd.f32 %v861, %v895
      %v912 = vadd.f32 %v862, %v908
      %s913 = scalar_lea.vmem %s1, 44
      %v914 = vld [vmem:[%s913] sm:$0xf]
      %v916 = vunpack.c.l.b16 %v404
      %v917 = vpack.c.b16 %v916, %v916
      %918 = vrot.lane.b32.xlu0 %v547, 112
      %v919 = vpop.permute.xlu0 %918
      %920 = vrot.lane.b32.xlu0 %v548, 112
      %v921 = vpop.permute.xlu0 %920
      %922 = vrot.lane.b32.xlu0 %v917, 112
      %v923 = vpop.permute.xlu0 %922
      %v924 = vsel %vm773, %v919, %v921
      %v925 = vsel %vm773, %v921, %v923
      %v927 = vsel %vm421, %v914, 0
      %v930 = vsel %vm425, %v924, 0
      %v933 = vsel %vm425, %v925, 0
      %935 = vmatpush.bf16.msra.mxu0 0
      %936 = vmatpush.bf16.msra.mxu0 0
      %937 = vmatpush.bf16.msra.mxu0 0
      %938 = vmatpush.bf16.msra.mxu0 0
      %939 = vmatpush.bf16.msra.mxu0 0
      %940 = vmatpush.bf16.msra.mxu0 0
      %941 = vmatpush.bf16.msra.mxu0 0
      %942 = vmatpush.bf16.msra.mxu0 %v930
      %943 = vmatmul.bf16.gmra.mxu0 %v927
      %v944 = vpop.f32.mrf.mxu0
      %v945 = vadd.f32 0.0, %v944
      %v946 = vpop.f32.mrf.mxu0
      %947 = vdwg.mxu0
      %948 = vmatpush.bf16.msra.mxu0 0
      %949 = vmatpush.bf16.msra.mxu0 0
      %950 = vmatpush.bf16.msra.mxu0 0
      %951 = vmatpush.bf16.msra.mxu0 0
      %952 = vmatpush.bf16.msra.mxu0 0
      %953 = vmatpush.bf16.msra.mxu0 0
      %954 = vmatpush.bf16.msra.mxu0 0
      %955 = vmatpush.bf16.msra.mxu0 %v933
      %956 = vmatmul.bf16.gmra.mxu0 %v927
      %v957 = vpop.f32.mrf.mxu0
      %v958 = vadd.f32 0.0, %v957
      %v959 = vpop.f32.mrf.mxu0
      %960 = vdwg.mxu0
      %v961 = vadd.f32 %v911, %v945
      %v962 = vadd.f32 %v912, %v958
      %s963 = scalar_lea.vmem %s1, 48
      %v964 = vld [vmem:[%s963] sm:$0xf]
      %v966 = vunpack.c.l.b16 %v406
      %v967 = vpack.c.b16 %v966, %v966
      %968 = vrot.lane.b32.xlu0 %v591, 112
      %v969 = vpop.permute.xlu0 %968
      %970 = vrot.lane.b32.xlu0 %v592, 112
      %v971 = vpop.permute.xlu0 %970
      %972 = vrot.lane.b32.xlu0 %v967, 112
      %v973 = vpop.permute.xlu0 %972
      %v974 = vsel %vm773, %v969, %v971
      %v975 = vsel %vm773, %v971, %v973
      %v977 = vsel %vm421, %v964, 0
      %v980 = vsel %vm425, %v974, 0
      %v983 = vsel %vm425, %v975, 0
      %985 = vmatpush.bf16.msra.mxu0 0
      %986 = vmatpush.bf16.msra.mxu0 0
      %987 = vmatpush.bf16.msra.mxu0 0
      %988 = vmatpush.bf16.msra.mxu0 0
      %989 = vmatpush.bf16.msra.mxu0 0
      %990 = vmatpush.bf16.msra.mxu0 0
      %991 = vmatpush.bf16.msra.mxu0 0
      %992 = vmatpush.bf16.msra.mxu0 %v980
      %993 = vmatmul.bf16.gmra.mxu0 %v977
      %v994 = vpop.f32.mrf.mxu0
      %v995 = vadd.f32 0.0, %v994
      %v996 = vpop.f32.mrf.mxu0
      %997 = vdwg.mxu0
      %998 = vmatpush.bf16.msra.mxu0 0
      %999 = vmatpush.bf16.msra.mxu0 0
      %1000 = vmatpush.bf16.msra.mxu0 0
      %1001 = vmatpush.bf16.msra.mxu0 0
      %1002 = vmatpush.bf16.msra.mxu0 0
      %1003 = vmatpush.bf16.msra.mxu0 0
      %1004 = vmatpush.bf16.msra.mxu0 0
      %1005 = vmatpush.bf16.msra.mxu0 %v983
      %1006 = vmatmul.bf16.gmra.mxu0 %v977
      %v1007 = vpop.f32.mrf.mxu0
      %v1008 = vadd.f32 0.0, %v1007
      %v1009 = vpop.f32.mrf.mxu0
      %1010 = vdwg.mxu0
      %v1011 = vadd.f32 %v961, %v995
      %v1012 = vadd.f32 %v962, %v1008
      %s1013 = scalar_lea.vmem %s1, 52
      %v1014 = vld [vmem:[%s1013] sm:$0xf]
      %v1016 = vunpack.c.l.b16 %v408
      %v1017 = vpack.c.b16 %v1016, %v1016
      %1018 = vrot.lane.b32.xlu0 %v635, 112
      %v1019 = vpop.permute.xlu0 %1018
      %1020 = vrot.lane.b32.xlu0 %v636, 112
      %v1021 = vpop.permute.xlu0 %1020
      %1022 = vrot.lane.b32.xlu0 %v1017, 112
      %v1023 = vpop.permute.xlu0 %1022
      %v1024 = vsel %vm773, %v1019, %v1021
      %v1025 = vsel %vm773, %v1021, %v1023
      %v1027 = vsel %vm421, %v1014, 0
      %v1030 = vsel %vm425, %v1024, 0
      %v1033 = vsel %vm425, %v1025, 0
      %1035 = vmatpush.bf16.msra.mxu0 0
      %1036 = vmatpush.bf16.msra.mxu0 0
      %1037 = vmatpush.bf16.msra.mxu0 0
      %1038 = vmatpush.bf16.msra.mxu0 0
      %1039 = vmatpush.bf16.msra.mxu0 0
      %1040 = vmatpush.bf16.msra.mxu0 0
      %1041 = vmatpush.bf16.msra.mxu0 0
      %1042 = vmatpush.bf16.msra.mxu0 %v1030
      %1043 = vmatmul.bf16.gmra.mxu0 %v1027
      %v1044 = vpop.f32.mrf.mxu0
      %v1045 = vadd.f32 0.0, %v1044
      %v1046 = vpop.f32.mrf.mxu0
      %1047 = vdwg.mxu0
      %1048 = vmatpush.bf16.msra.mxu0 0
      %1049 = vmatpush.bf16.msra.mxu0 0
      %1050 = vmatpush.bf16.msra.mxu0 0
      %1051 = vmatpush.bf16.msra.mxu0 0
      %1052 = vmatpush.bf16.msra.mxu0 0
      %1053 = vmatpush.bf16.msra.mxu0 0
      %1054 = vmatpush.bf16.msra.mxu0 0
      %1055 = vmatpush.bf16.msra.mxu0 %v1033
      %1056 = vmatmul.bf16.gmra.mxu0 %v1027
      %v1057 = vpop.f32.mrf.mxu0
      %v1058 = vadd.f32 0.0, %v1057
      %v1059 = vpop.f32.mrf.mxu0
      %1060 = vdwg.mxu0
      %v1061 = vadd.f32 %v1011, %v1045
      %v1062 = vadd.f32 %v1012, %v1058
      %s1063 = scalar_lea.vmem %s1, 56
      %v1064 = vld [vmem:[%s1063] sm:$0xf]
      %v1066 = vunpack.c.l.b16 %v410
      %v1067 = vpack.c.b16 %v1066, %v1066
      %1068 = vrot.lane.b32.xlu0 %v679, 112
      %v1069 = vpop.permute.xlu0 %1068
      %1070 = vrot.lane.b32.xlu0 %v680, 112
      %v1071 = vpop.permute.xlu0 %1070
      %1072 = vrot.lane.b32.xlu0 %v1067, 112
      %v1073 = vpop.permute.xlu0 %1072
      %v1074 = vsel %vm773, %v1069, %v1071
      %v1075 = vsel %vm773, %v1071, %v1073
      %v1077 = vsel %vm421, %v1064, 0
      %v1080 = vsel %vm425, %v1074, 0
      %v1083 = vsel %vm425, %v1075, 0
      %1085 = vmatpush.bf16.msra.mxu0 0
      %1086 = vmatpush.bf16.msra.mxu0 0
      %1087 = vmatpush.bf16.msra.mxu0 0
      %1088 = vmatpush.bf16.msra.mxu0 0
      %1089 = vmatpush.bf16.msra.mxu0 0
      %1090 = vmatpush.bf16.msra.mxu0 0
      %1091 = vmatpush.bf16.msra.mxu0 0
      %1092 = vmatpush.bf16.msra.mxu0 %v1080
      %1093 = vmatmul.bf16.gmra.mxu0 %v1077
      %v1094 = vpop.f32.mrf.mxu0
      %v1095 = vadd.f32 0.0, %v1094
      %v1096 = vpop.f32.mrf.mxu0
      %1097 = vdwg.mxu0
      %1098 = vmatpush.bf16.msra.mxu0 0
      %1099 = vmatpush.bf16.msra.mxu0 0
      %1100 = vmatpush.bf16.msra.mxu0 0
      %1101 = vmatpush.bf16.msra.mxu0 0
      %1102 = vmatpush.bf16.msra.mxu0 0
      %1103 = vmatpush.bf16.msra.mxu0 0
      %1104 = vmatpush.bf16.msra.mxu0 0
      %1105 = vmatpush.bf16.msra.mxu0 %v1083
      %1106 = vmatmul.bf16.gmra.mxu0 %v1077
      %v1107 = vpop.f32.mrf.mxu0
      %v1108 = vadd.f32 0.0, %v1107
      %v1109 = vpop.f32.mrf.mxu0
      %1110 = vdwg.mxu0
      %v1111 = vadd.f32 %v1061, %v1095
      %v1112 = vadd.f32 %v1062, %v1108
      %s1113 = scalar_lea.vmem %s1, 60
      %v1114 = vld [vmem:[%s1113] sm:$0xf]
      %v1116 = vunpack.c.l.b16 %v412
      %v1117 = vpack.c.b16 %v1116, %v1116
      %1118 = vrot.lane.b32.xlu0 %v723, 112
      %v1119 = vpop.permute.xlu0 %1118
      %1120 = vrot.lane.b32.xlu0 %v724, 112
      %v1121 = vpop.permute.xlu0 %1120
      %1122 = vrot.lane.b32.xlu0 %v1117, 112
      %v1123 = vpop.permute.xlu0 %1122
      %v1124 = vsel %vm773, %v1119, %v1121
      %v1125 = vsel %vm773, %v1121, %v1123
      %v1127 = vsel %vm421, %v1114, 0
      %v1130 = vsel %vm425, %v1124, 0
      %v1133 = vsel %vm425, %v1125, 0
      %1135 = vmatpush.bf16.msra.mxu0 0
      %1136 = vmatpush.bf16.msra.mxu0 0
      %1137 = vmatpush.bf16.msra.mxu0 0
      %1138 = vmatpush.bf16.msra.mxu0 0
      %1139 = vmatpush.bf16.msra.mxu0 0
      %1140 = vmatpush.bf16.msra.mxu0 0
      %1141 = vmatpush.bf16.msra.mxu0 0
      %1142 = vmatpush.bf16.msra.mxu0 %v1130
      %1143 = vmatmul.bf16.gmra.mxu0 %v1127
      %v1144 = vpop.f32.mrf.mxu0
      %v1145 = vadd.f32 0.0, %v1144
      %v1146 = vpop.f32.mrf.mxu0
      %1147 = vdwg.mxu0
      %1148 = vmatpush.bf16.msra.mxu0 0
      %1149 = vmatpush.bf16.msra.mxu0 0
      %1150 = vmatpush.bf16.msra.mxu0 0
      %1151 = vmatpush.bf16.msra.mxu0 0
      %1152 = vmatpush.bf16.msra.mxu0 0
      %1153 = vmatpush.bf16.msra.mxu0 0
      %1154 = vmatpush.bf16.msra.mxu0 0
      %1155 = vmatpush.bf16.msra.mxu0 %v1133
      %1156 = vmatmul.bf16.gmra.mxu0 %v1127
      %v1157 = vpop.f32.mrf.mxu0
      %v1158 = vadd.f32 0.0, %v1157
      %v1159 = vpop.f32.mrf.mxu0
      %1160 = vdwg.mxu0
      %v1161 = vadd.f32 %v1111, %v1145
      %v1162 = vadd.f32 %v1112, %v1158
      %v1163 = vpack.c.bf16 %v1162, %v1161
      %1164 = vst [vmem:[%s258] sm:$0xff] %v1163
      %v1165 = vadd.f32 %v1161, %v1162
      %1166 = vadd.xlane.f32.xlu0 %v1165
      %v1167 = vpop.xlane.xlu0 %1166
      %v1168 = vrcp.pop 256.0
      %v1169 = vmul.f32 256.0, %v1168
      %v1170 = vsub.f32 1.0, %v1169
      %v1171 = vmul.f32 %v1168, %v1170
      %v1172 = vadd.f32 %v1168, %v1171
      %vm1173 = vweird.f32 %v1168
      %v1174 = vsel %vm1173, %v1168, %v1172
      %v1175 = vmul.f32 %v1167, %v1174
      %v1176 = vsub.f32 %v1161, %v1175
      %v1177 = vsub.f32 %v1162, %v1175
      %vm1178 = vcmask 7168
      %1179 = vst.msk [vmem:[%s267] sm:$0xff] %vm1178, %v1175
      %v1180 = vmul.f32 %v1176, %v1176
      %v1181 = vmul.f32 %v1177, %v1177
      %v1182 = vadd.f32 %v1180, %v1181
      %1183 = vadd.xlane.f32.xlu0 %v1182
      %v1184 = vpop.xlane.xlu0 %1183
      %1185 = vst.msk [vmem:[%s275] sm:$0xff] %vm1178, %v1184
      %s1186 = smul.u32 2, %s20
      %p1187 = scmp.lt.s32.totalorder %s21, 1
      %s1188 = scalar_select %p1187, %s21, 1
      %p1189 = scmp.lt.s32.totalorder %s1186, 1
      %s1190 = scalar_select %p1189, %s1186, 1
      %s1191 = smul.addr %s1188, 2
      %s1192 = sadd.s32 %s1190, %s1191
      %s1193 = smul.addr %s1192, 4
      %s1194 = scalar_lea.vmem %s2, %s1193
      %p1195 = scmp.lt.s32.totalorder %s20, 0
      %s1196 = scalar_select %p1195, %s20, 0
      %p1197 = scmp.lt.s32.totalorder %s21, 1
      %s1198 = scalar_select %p1197, %s21, 1
      %s1199 = smul.addr %s1196, 2
      %s1200 = sadd.s32 %s1198, %s1199
      %s1201 = smul.addr %s1200, 8
      %s1202 = scalar_lea.vmem %s3, %s1201
      %p1203 = scmp.lt.s32.totalorder %s20, 0
      %s1204 = scalar_select %p1203, %s20, 0
      %p1205 = scmp.lt.s32.totalorder %s21, 1
      %s1206 = scalar_select %p1205, %s21, 1
      %s1207 = smul.addr %s1204, 2
      %s1208 = sadd.s32 %s1206, %s1207
      %s1209 = smul.addr %s1208, 8
      %s1210 = scalar_lea.vmem %s4, %s1209
      // Predicated region
      $region29: #{unet_skip_down_forward.2} parent=27 // pred_check
        %p1211 = pneg %p97
      $region30: #{unet_skip_down_forward.2} parent=27 // pred_check_branch
        %1213 = sbr.rel (%p1211) target = $region32
      $region31: #{unet_skip_down_forward.2} parent=27 // pred_region
        %s1214 = smul.u32 2, %s20
      $region32: #{unet_skip_down_forward.2} parent=27 // pred_fallthru
        _
      // Predicated region
      $region33: #{unet_skip_down_forward.2} parent=27 // pred_check
        %p1215 = pneg %p125
      $region34: #{unet_skip_down_forward.2} parent=27 // pred_check_branch
        %1217 = sbr.rel (%p1215) target = $region36
      $region35: #{unet_skip_down_forward.2} parent=27 // pred_region
        _
      $region36: #{unet_skip_down_forward.2} parent=27 // pred_fallthru
        _
      // Predicated region
      $region37: #{unet_skip_down_forward.2} parent=27 // pred_check
        %p1218 = pneg %p153
      $region38: #{unet_skip_down_forward.2} parent=27 // pred_check_branch
        %1220 = sbr.rel (%p1218) target = $region40
      $region39: #{unet_skip_down_forward.2} parent=27 // pred_region
        _
      $region40: #{unet_skip_down_forward.2} parent=27 // pred_fallthru
        _
    $region28: #{unet_skip_down_forward.2} parent=5 // pred_fallthru
      _
    %p1221 = scmp.le.s32.totalorder 2, %s11
    // Predicated region
    $region41: #{unet_skip_down_forward.2} parent=5 // pred_check
      %p1222 = pneg %p1221
    $region42: #{unet_skip_down_forward.2} parent=5 // pred_check_branch
      %1224 = sbr.rel (%p1222) target = $region44
    $region43: #{unet_skip_down_forward.2} parent=5 // pred_region
      %s1225 = ssub.s32 %s11, 2
      // Predicated region
      $region45: #{unet_skip_down_forward.2} parent=43 // pred_check
        %p1226 = pneg %p103
      $region46: #{unet_skip_down_forward.2} parent=43 // pred_check_branch
        %1228 = sbr.rel (%p1226) target = $region48
      $region47: #{unet_skip_down_forward.2} parent=43 // pred_region
        %s1229 = smul.u32 2, %s22
        %p1230 = scmp.lt.s32.totalorder %s23, 1
        %s1231 = scalar_select %p1230, %s23, 1
        %p1232 = scmp.lt.s32.totalorder %s1229, 1
        %s1233 = scalar_select %p1232, %s1229, 1
        %s1234 = smul.addr %s1231, 2
        %s1235 = sadd.s32 %s1233, %s1234
        %s1236 = smul.addr %s1235, 4
        %s1237 = scalar_lea.vmem %s2, %s1236
      $region48: #{unet_skip_down_forward.2} parent=43 // pred_fallthru
        _
      // Predicated region
      $region49: #{unet_skip_down_forward.2} parent=43 // pred_check
        %p1238 = pneg %p131
      $region50: #{unet_skip_down_forward.2} parent=43 // pred_check_branch
        %1240 = sbr.rel (%p1238) target = $region52
      $region51: #{unet_skip_down_forward.2} parent=43 // pred_region
        %p1241 = scmp.lt.s32.totalorder %s22, 0
        %s1242 = scalar_select %p1241, %s22, 0
        %p1243 = scmp.lt.s32.totalorder %s23, 1
        %s1244 = scalar_select %p1243, %s23, 1
        %s1245 = smul.addr %s1242, 2
        %s1246 = sadd.s32 %s1244, %s1245
        %s1247 = smul.addr %s1246, 8
        %s1248 = scalar_lea.vmem %s3, %s1247
      $region52: #{unet_skip_down_forward.2} parent=43 // pred_fallthru
        _
      // Predicated region
      $region53: #{unet_skip_down_forward.2} parent=43 // pred_check
        %p1249 = pneg %p159
      $region54: #{unet_skip_down_forward.2} parent=43 // pred_check_branch
        %1251 = sbr.rel (%p1249) target = $region56
      $region55: #{unet_skip_down_forward.2} parent=43 // pred_region
        %p1252 = scmp.lt.s32.totalorder %s22, 0
        %s1253 = scalar_select %p1252, %s22, 0
        %p1254 = scmp.lt.s32.totalorder %s23, 1
        %s1255 = scalar_select %p1254, %s23, 1
        %s1256 = smul.addr %s1253, 2
        %s1257 = sadd.s32 %s1255, %s1256
        %s1258 = smul.addr %s1257, 8
        %s1259 = scalar_lea.vmem %s4, %s1258
      $region56: #{unet_skip_down_forward.2} parent=43 // pred_fallthru
        _
    $region44: #{unet_skip_down_forward.2} parent=5 // pred_fallthru
      _
  $region6: #{unet_skip_down_forward.2} parent=0 // loop_footer
    %s15 = sadd.s32 1, %s11
  $region7: #{unet_skip_down_forward.2} parent=0 // loop_footer_branch
    %10 = sbr.rel target = $region3
  $region8: #{unet_skip_down_forward.2} parent=0 // loop_exit
    _

// kernel: unet_skip_down_forward.3
$region0: #{unet_skip_down_forward.3}
  #allocation0 [shape = 'u32[]', space=smem, size = 0x4, offset = 0x4, fixed_abs, tag = 'smem constant byte address 0x4 - core index']
  #allocation1 [shape = 'u32[72,128]{1,0:T(1,128)}', space=vmem, size = 0x9000, scoped, tag = 'internal scratch']
  %s0 = inlined_call_operand.vmem [shape: bf16[2,8,256], index: 0, kind: input, shape index: {}]
  %s1 = inlined_call_operand.vmem [shape: f32[1,8,1], index: 1, kind: input, shape index: {}]
  %s2 = inlined_call_operand.vmem [shape: f32[1,8,1], index: 2, kind: input, shape index: {}]
  %s3 = inlined_call_operand.vmem [shape: f32[2,8,256], index: 3, kind: output, shape index: {}]
  %s4 = sld [smem:[#allocation0]]
  $region45: #{unet_skip_down_forward.3} parent=0
    _
  %s6 = ssub.s32 1, %s4
  %s7 = scalar_select 0, %s6, %s4
  loop: start=0, step=1, limit=4
  $region2: #{unet_skip_down_forward.3} parent=0 // loop_pre_header
    _
  $region3: #{unet_skip_down_forward.3} parent=0 // loop_header
    %s9 = sphi 0, %s13
    %p10 = scmp.ge.s32.totalorder %s9, 4
    %s16 = sphi 0, %s28
    %s17 = sphi 0, %s24
    %s18 = sphi 0, %s16
    %s19 = sphi 0, %s17
    %s20 = sphi 0, %s18
    %s21 = sphi 0, %s19
    %s33 = sphi 0, %s35
    %s36 = sphi 0, %s33
    %s37 = sphi 0, %s36
    %s53 = sphi 0, %s37
    %s57 = sphi 0, %s57
    %s59 = sphi 0, %s57
    %s60 = sphi 0, %s59
    %s74 = sphi 0, %s60
    %s78 = sphi 0, %s78
    %s80 = sphi 0, %s78
    %s81 = sphi 0, %s80
    %s95 = sphi 0, %s81
    %s103 = sphi 0, %s105
    %s106 = sphi 0, %s103
    %s107 = sphi 0, %s106
    %s123 = sphi 0, %s107
  $region4: #{unet_skip_down_forward.3} parent=0 // loop_header_branch
    %12 = sbr.rel (%p10) target = $region8
  $region5: #{unet_skip_down_forward.3} parent=0 // loop_body
    %s14 = ssub.s32 %s9, 1
    %s15 = ssub.s32 %s9, 2
    %s22 = sadd.s32 1, %s17
    %p23 = scmp.ge.s32.totalorder %s22, 2
    %s24 = scalar_select %p23, 0, %s22
    %s25 = sadd.s32 1, %s16
    %s26 = scalar_select %p23, %s25, %s16
    %p27 = scmp.ge.s32.totalorder %s26, 1
    %s28 = scalar_select %p27, 0, %s26
    %s29 = ssub.s32 %s17, %s24
    %s30 = ssub.s32 %s16, %s28
    %s31 = sor.u32 %s29, %s30
    %p32 = scmp.eq.s32.totalorder %s31, 0
    %s34 = sadd.s32 %s33, 1
    %s35 = scalar_select %p32, %s33, %s34
    %p38 = pneg %p32
    %p39 = scmp.eq.s32.totalorder %s9, 1
    %p40 = por %p38, %p39
    %p41 = scmp.ne.s32.totalorder %s33, %s36
    %p42 = scmp.eq.s32.totalorder %s9, 0
    %p43 = por %p41, %p42
    %p44 = scmp.ne.s32.totalorder %s33, %s36
    %p45 = scmp.eq.s32.totalorder %s14, 1
    %p46 = por %p44, %p45
    %p47 = scmp.ne.s32.totalorder %s36, %s37
    %p48 = scmp.eq.s32.totalorder %s14, 0
    %p49 = por %p47, %p48
    %p50 = scmp.ne.s32.totalorder %s36, %s37
    %p51 = scmp.eq.s32.totalorder %s15, 1
    %p52 = por %p50, %p51
    %p54 = scmp.ne.s32.totalorder %s37, %s53
    %p55 = scmp.eq.s32.totalorder %s15, 0
    %p56 = por %p54, %p55
    %s58 = sadd.s32 %s57, 1
    %p61 = scmp.eq.s32.totalorder %s9, 1
    %p62 = scmp.ne.s32.totalorder %s57, %s59
    %p63 = scmp.eq.s32.totalorder %s9, 0
    %p64 = por %p62, %p63
    %p65 = scmp.ne.s32.totalorder %s57, %s59
    %p66 = scmp.eq.s32.totalorder %s14, 1
    %p67 = por %p65, %p66
    %p68 = scmp.ne.s32.totalorder %s59, %s60
    %p69 = scmp.eq.s32.totalorder %s14, 0
    %p70 = por %p68, %p69
    %p71 = scmp.ne.s32.totalorder %s59, %s60
    %p72 = scmp.eq.s32.totalorder %s15, 1
    %p73 = por %p71, %p72
    %p75 = scmp.ne.s32.totalorder %s60, %s74
    %p76 = scmp.eq.s32.totalorder %s15, 0
    %p77 = por %p75, %p76
    %s79 = sadd.s32 %s78, 1
    %p82 = scmp.eq.s32.totalorder %s9, 1
    %p83 = scmp.ne.s32.totalorder %s78, %s80
    %p84 = scmp.eq.s32.totalorder %s9, 0
    %p85 = por %p83, %p84
    %p86 = scmp.ne.s32.totalorder %s78, %s80
    %p87 = scmp.eq.s32.totalorder %s14, 1
    %p88 = por %p86, %p87
    %p89 = scmp.ne.s32.totalorder %s80, %s81
    %p90 = scmp.eq.s32.totalorder %s14, 0
    %p91 = por %p89, %p90
    %p92 = scmp.ne.s32.totalorder %s80, %s81
    %p93 = scmp.eq.s32.totalorder %s15, 1
    %p94 = por %p92, %p93
    %p96 = scmp.ne.s32.totalorder %s81, %s95
    %p97 = scmp.eq.s32.totalorder %s15, 0
    %p98 = por %p96, %p97
    %s99 = ssub.s32 %s17, %s24
    %s100 = ssub.s32 %s16, %s28
    %s101 = sor.u32 %s99, %s100
    %p102 = scmp.eq.s32.totalorder %s101, 0
    %s104 = sadd.s32 %s103, 1
    %s105 = scalar_select %p102, %s103, %s104
    %p108 = pneg %p102
    %p109 = scmp.eq.s32.totalorder %s9, 1
    %p110 = por %p108, %p109
    %p111 = scmp.ne.s32.totalorder %s103, %s106
    %p112 = scmp.eq.s32.totalorder %s9, 0
    %p113 = por %p111, %p112
    %p114 = scmp.ne.s32.totalorder %s103, %s106
    %p115 = scmp.eq.s32.totalorder %s14, 1
    %p116 = por %p114, %p115
    %p117 = scmp.ne.s32.totalorder %s106, %s107
    %p118 = scmp.eq.s32.totalorder %s14, 0
    %p119 = por %p117, %p118
    %p120 = scmp.ne.s32.totalorder %s106, %s107
    %p121 = scmp.eq.s32.totalorder %s15, 1
    %p122 = por %p120, %p121
    %p124 = scmp.ne.s32.totalorder %s107, %s123
    %p125 = scmp.eq.s32.totalorder %s15, 0
    %p126 = por %p124, %p125
    %p127 = scmp.le.s32.totalorder 1, %s9
    %p128 = scmp.lt.s32.totalorder %s9, 3
    %p129 = pnand %p127, %p128
    %p130 = pneg %p129
    // Predicated region
    $region9: #{unet_skip_down_forward.3} parent=5 // pred_check
      _
    $region10: #{unet_skip_down_forward.3} parent=5 // pred_check_branch
      %132 = sbr.rel (%p129) target = $region12
    $region11: #{unet_skip_down_forward.3} parent=5 // pred_region
      %s133 = ssub.s32 %s9, 1
      // Predicated region
      $region13: #{unet_skip_down_forward.3} parent=11 // pred_check
        %p134 = pneg %p70
      $region14: #{unet_skip_down_forward.3} parent=11 // pred_check_branch
        %136 = sbr.rel (%p134) target = $region16
      $region15: #{unet_skip_down_forward.3} parent=11 // pred_region
        _
      $region16: #{unet_skip_down_forward.3} parent=11 // pred_fallthru
        _
      // Predicated region
      $region17: #{unet_skip_down_forward.3} parent=11 // pred_check
        %p137 = pneg %p91
      $region18: #{unet_skip_down_forward.3} parent=11 // pred_check_branch
        %139 = sbr.rel (%p137) target = $region20
      $region19: #{unet_skip_down_forward.3} parent=11 // pred_region
        _
      $region20: #{unet_skip_down_forward.3} parent=11 // pred_fallthru
        _
    $region12: #{unet_skip_down_forward.3} parent=5 // pred_fallthru
      _
    %p140 = scmp.lt.s32.totalorder %s9, 2
    // Predicated region
    $region21: #{unet_skip_down_forward.3} parent=5 // pred_check
      %p141 = pneg %p140
    $region22: #{unet_skip_down_forward.3} parent=5 // pred_check_branch
      %143 = sbr.rel (%p141) target = $region24
    $region23: #{unet_skip_down_forward.3} parent=5 // pred_region
      // Predicated region
      $region25: #{unet_skip_down_forward.3} parent=23 // pred_check
        %p144 = pneg %p43
      $region26: #{unet_skip_down_forward.3} parent=23 // pred_check_branch
        %146 = sbr.rel (%p144) target = $region28
      $region27: #{unet_skip_down_forward.3} parent=23 // pred_region
        %s147 = smul.u32 2, %s16
        %p148 = scmp.lt.s32.totalorder %s17, 1
        %s149 = scalar_select %p148, %s17, 1
        %p150 = scmp.lt.s32.totalorder %s147, 1
        %s151 = scalar_select %p150, %s147, 1
        %s152 = smul.addr %s149, 2
        %s153 = sadd.s32 %s151, %s152
        %s154 = smul.addr %s153, 4
        %s155 = scalar_lea.vmem %s0, %s154
        %s156 = smul.u32 2, %s16
      $region28: #{unet_skip_down_forward.3} parent=23 // pred_fallthru
        _
    $region24: #{unet_skip_down_forward.3} parent=5 // pred_fallthru
      _
    %p157 = scmp.le.s32.totalorder 1, %s9
    %p158 = scmp.lt.s32.totalorder %s9, 3
    %p159 = pnand %p157, %p158
    %p160 = pneg %p159
    // Predicated region
    $region29: #{unet_skip_down_forward.3} parent=5 // pred_check
      _
    $region30: #{unet_skip_down_forward.3} parent=5 // pred_check_branch
      %162 = sbr.rel (%p159) target = $region32
    $region31: #{unet_skip_down_forward.3} parent=5 // pred_region
      %s163 = ssub.s32 %s9, 1
      %s164 = smul.u32 2, %s18
      %p165 = scmp.lt.s32.totalorder %s19, 1
      %s166 = scalar_select %p165, %s19, 1
      %p167 = scmp.lt.s32.totalorder %s164, 1
      %s168 = scalar_select %p167, %s164, 1
      %s169 = smul.addr %s166, 2
      %s170 = sadd.s32 %s168, %s169
      %s171 = smul.addr %s170, 4
      %s172 = scalar_lea.vmem %s0, %s171
      %p173 = pneg %p49
      %p174 = pneg %p46
      %p175 = pneg %p70
      %p176 = pneg %p67
      %p177 = pneg %p91
      %p178 = pneg %p88
      %p179 = pneg %p119
      %p180 = pneg %p116
      %s181 = smul.u32 2, %s18
      %p182 = scmp.lt.s32.totalorder %s19, 1
      %s183 = scalar_select %p182, %s19, 1
      %p184 = scmp.lt.s32.totalorder %s181, 1
      %s185 = scalar_select %p184, %s181, 1
      %s186 = smul.addr %s183, 2
      %s187 = sadd.s32 %s185, %s186
      %s188 = smul.addr %s187, 8
      %s189 = scalar_lea.vmem %s3, %s188
      %s190 = smul.u32 2, %s18
      %p191 = scmp.lt.s32.totalorder %s19, 1
      %s192 = scalar_select %p191, %s19, 1
      %p193 = scmp.lt.s32.totalorder %s190, 1
      %s194 = scalar_select %p193, %s190, 1
      %s195 = smul.addr %s192, 2
      %s196 = sadd.s32 %s194, %s195
      %s197 = smul.addr %s196, 4
      %s198 = scalar_lea.vmem %s0, %s197
      %s199 = smul.u32 2, %s18
      %s200 = smul.u32 2, %s18
      %p201 = scmp.lt.s32.totalorder %s19, 1
      %s202 = scalar_select %p201, %s19, 1
      %p203 = scmp.lt.s32.totalorder %s200, 1
      %s204 = scalar_select %p203, %s200, 1
      %s205 = smul.addr %s202, 2
      %s206 = sadd.s32 %s204, %s205
      %s207 = smul.addr %s206, 8
      %s208 = scalar_lea.vmem %s3, %s207
      %s209 = smul.u32 2, %s18
      %v210 = vld [vmem:[%s198] sm:$0xff]
      %v211 = vunpack.c.l.bf16 %v210
      %v212 = vunpack.c.h.bf16 %v210
      %v213 = vld [vmem:[%s1] sm:$0xff]
      %215 = vset.pattern.permute.xlu0 0
      %216 = vperm.xlu0 %215, %v213
      %v217 = vpop.permute.xlu0 %216
      %v219 = vmul.f32 %v211, %v217
      %v220 = vmul.f32 %v212, %v217
      %v221 = vld [vmem:[%s2] sm:$0xff]
      %223 = vset.pattern.permute.xlu0 0
      %224 = vperm.xlu0 %223, %v221
      %v225 = vpop.permute.xlu0 %224
      %v227 = vadd.f32 %v219, %v225
      %v228 = vadd.f32 %v220, %v225
      %229 = vst [vmem:[%s208] sm:$0xff] %v227
      %230 = vst [vmem:[%s208 + $0x8] sm:$0xff] %v228
      %s231 = smul.u32 2, %s18
      %p232 = scmp.lt.s32.totalorder %s19, 1
      %s233 = scalar_select %p232, %s19, 1
      %p234 = scmp.lt.s32.totalorder %s231, 1
      %s235 = scalar_select %p234, %s231, 1
      %s236 = smul.addr %s233, 2
      %s237 = sadd.s32 %s235, %s236
      %s238 = smul.addr %s237, 8
      %s239 = scalar_lea.vmem %s3, %s238
      // Predicated region
      $region33: #{unet_skip_down_forward.3} parent=31 // pred_check
        %p240 = pneg %p116
      $region34: #{unet_skip_down_forward.3} parent=31 // pred_check_branch
        %242 = sbr.rel (%p240) target = $region36
      $region35: #{unet_skip_down_forward.3} parent=31 // pred_region
        %s243 = smul.u32 2, %s18
      $region36: #{unet_skip_down_forward.3} parent=31 // pred_fallthru
        _
    $region32: #{unet_skip_down_forward.3} parent=5 // pred_fallthru
      _
    %p244 = scmp.le.s32.totalorder 2, %s9
    // Predicated region
    $region37: #{unet_skip_down_forward.3} parent=5 // pred_check
      %p245 = pneg %p244
    $region38: #{unet_skip_down_forward.3} parent=5 // pred_check_branch
      %247 = sbr.rel (%p245) target = $region40
    $region39: #{unet_skip_down_forward.3} parent=5 // pred_region
      %s248 = ssub.s32 %s9, 2
      // Predicated region
      $region41: #{unet_skip_down_forward.3} parent=39 // pred_check
        %p249 = pneg %p122
      $region42: #{unet_skip_down_forward.3} parent=39 // pred_check_branch
        %251 = sbr.rel (%p249) target = $region44
      $region43: #{unet_skip_down_forward.3} parent=39 // pred_region
        %s252 = smul.u32 2, %s20
        %p253 = scmp.lt.s32.totalorder %s21, 1
        %s254 = scalar_select %p253, %s21, 1
        %p255 = scmp.lt.s32.totalorder %s252, 1
        %s256 = scalar_select %p255, %s252, 1
        %s257 = smul.addr %s254, 2
        %s258 = sadd.s32 %s256, %s257
        %s259 = smul.addr %s258, 8
        %s260 = scalar_lea.vmem %s3, %s259
      $region44: #{unet_skip_down_forward.3} parent=39 // pred_fallthru
        _
    $region40: #{unet_skip_down_forward.3} parent=5 // pred_fallthru
      _
  $region6: #{unet_skip_down_forward.3} parent=0 // loop_footer
    %s13 = sadd.s32 1, %s9
  $region7: #{unet_skip_down_forward.3} parent=0 // loop_footer_branch
    %8 = sbr.rel target = $region3
  $region8: #{unet_skip_down_forward.3} parent=0 // loop_exit
    _

</llo_original>
